<compile_context>
chip_gen: v5e
topology: v5e:2x2
jax: 0.10.0
libtpu: 0.0.40
codegen_flags: <defaults>
</compile_context>

<pallas_src>
import functools
from typing import NamedTuple

import jax
import jax.numpy as jnp
from jax.experimental import pallas as pl
from jax.experimental.pallas import tpu as pltpu


def _round_up(x, m):
    return ((x + m - 1) // m) * m


# Recommended per-layer (tk, tn) for the FULL-SIZED model (documentation /
# production use; the __main__ test below runs at small shapes):
#   block1 (16000 -> 10000): tk=3200 (divides 16000 exactly, nk=5),
#                            tn=2560 (N_pad=10240, 2.4% pad, nj=4 even)
#   block2 (10000 -> 10000): tk=2560, tn=2560 (pads to 10240, nk=nj=4)
#   block3 (10000 -> 10000): tk=2560, tn=2560
#   fc     (10000 -> 16000): tk=2560, tn=4096 (N_pad=16384, 2.4% pad, nj=4 even)
#                            (single-TC chips may prefer tn=3200: zero pad, nj=5)
FULL_MODEL_TILE_PLAN = {
    "block1": dict(tk=3200, tn=2560),
    "block2": dict(tk=2560, tn=2560),
    "block3": dict(tk=2560, tn=2560),
    "fc": dict(tk=2560, tn=4096),
}


class PackedLinear(NamedTuple):
    """One-time packed parameters for a weight-streaming Linear layer.

    Contains arrays plus plain-python static metadata; not meant to be passed
    through jit as a traced argument.
    """
    w_tiles: jax.Array      # (nj, nk, tk, tn) bf16, per-tile contiguous in HBM
    b_pad: jax.Array        # (1, N_pad) f32
    in_features: int
    out_features: int
    k_pad: int
    n_pad: int
    tk: int
    tn: int


def init_linear_params(key, in_features, out_features):
    """PyTorch nn.Linear default init U(-1/sqrt(in), 1/sqrt(in)).

    Weight is returned already transposed to (in_features, out_features).
    """
    kw, kb = jax.random.split(key)
    bound = 1.0 / float(in_features) ** 0.5
    w_t = jax.random.uniform(kw, (in_features, out_features), jnp.float32,
                             -bound, bound)
    b = jax.random.uniform(kb, (out_features,), jnp.float32, -bound, bound)
    return w_t, b


def pack_linear_params(w_t, b, *, tk=2048, tn=2048,
                       weight_dtype=jnp.bfloat16):
    """ONE-TIME prep: pad ragged dims, cast to bf16, repack per-tile contiguous.

    This is the work that must never run inside the forward pass.
    """
    K, N = w_t.shape
    assert b.shape == (N,)

    # Clamp tile sizes for small problems; keep lane (128) alignment.
    tk_eff = min(tk, _round_up(K, 128))
    tn_eff = min(tn, _round_up(N, 128))
    assert tk_eff % 128 == 0 and tn_eff % 128 == 0
    k_pad = _round_up(K, tk_eff)
    n_pad = _round_up(N, tn_eff)
    nk = k_pad // tk_eff
    nj = n_pad // tn_eff

    w_t = w_t.astype(weight_dtype)
    if (k_pad, n_pad) != (K, N):
        # Zero rows / columns contribute nothing; math is unchanged.
        w_t = jnp.pad(w_t, ((0, k_pad - K), (0, n_pad - N)))

    # Per-tile contiguous layout (nj, nk, tk, tn): each weight-tile DMA becomes
    # one contiguous tk*tn*2-byte transfer (fewer descriptors, better sustained
    # HBM bandwidth).
    w_tiles = w_t.reshape(nk, tk_eff, nj, tn_eff).transpose(2, 0, 1, 3)

    b_pad = jnp.pad(b.astype(jnp.float32), ((0, n_pad - N),)).reshape(1, n_pad)
    return PackedLinear(w_tiles, b_pad, K, N, k_pad, n_pad, tk_eff, tn_eff)


def _linear_kernel(x_ref, w_ref, b_ref, o_ref, *, apply_relu):
    """One (M, tn) output tile, accumulated over the K (reduction) grid axis.

    x_ref: (nk, M, tk) bf16 -- whole (padded) activation, VMEM-resident
                                (constant index_map -> DMA'd once)
    w_ref: (tk, tn)    bf16 -- one weight tile streamed from HBM
                                (leading (nj, nk) dims squeezed away)
    b_ref: (1, tn)     f32  -- bias tile
    o_ref: (M, tn)     f32  -- output tile; resident across the K axis, so it
                               doubles as the accumulator (no scratch needed)
    """
    k = pl.program_id(1)

    @pl.when(k == 0)
    def _():
        o_ref[...] = jnp.zeros_like(o_ref)

    # bf16 x bf16 -> f32 on the MXU; no in-VMEM upcast temp.
    o_ref[...] += jnp.dot(x_ref[k], w_ref[...],
                          preferred_element_type=jnp.float32)

    @pl.when(k == pl.num_programs(1) - 1)
    def _():
        out = o_ref[...] + b_ref[...]        # (1, tn) bias broadcasts over rows
        if apply_relu:
            out = jnp.maximum(out, 0.0)
        o_ref[...] = out


def linear_pallas(x, p: PackedLinear, *, apply_relu,
                  vmem_limit_bytes=56 * 1024 * 1024,
                  weight_buffers=None):
    """y = relu?(x @ W^T + b) as a weight-streaming Pallas kernel.

    x: (M, K) float32 (or bfloat16)
    p: PackedLinear produced once by pack_linear_params.
    weight_buffers: optional pipeline depth for the weight stream (e.g. 3 on
        v7x once VMEM allows); None keeps the default double buffering.
    """
    M, K = x.shape
    assert K == p.in_features, (K, p.in_features)
    nk = p.k_pad // p.tk
    nj = p.n_pad // p.tn

    # Tiny per-call activation prep (tens of KiB): cast to bf16 once, zero-pad
    # the ragged K dim, and lay K chunks along a leading axis so the kernel
    # addresses them with a cheap leading-dim index (no per-step DMA).
    x = x.astype(jnp.bfloat16)
    if p.k_pad != K:
        x = jnp.pad(x, ((0, 0), (0, p.k_pad - K)))
    x3 = x.reshape(M, nk, p.tk).transpose(1, 0, 2)            # (nk, M, tk)

    w_spec_kwargs = {}
    if weight_buffers is not None and weight_buffers != 2:
        w_spec_kwargs = dict(pipeline_mode=pl.Buffered(weight_buffers))

    kernel = functools.partial(_linear_kernel, apply_relu=apply_relu)

    out = pl.pallas_call(
        kernel,
        out_shape=jax.ShapeDtypeStruct((M, p.n_pad), jnp.float32),
        grid_spec=pltpu.PrefetchScalarGridSpec(
            num_scalar_prefetch=0,
            grid=(nj, nk),                                    # (N tiles, K tiles)
            in_specs=[
                # Activation: constant index map => fetched once, VMEM resident.
                pl.BlockSpec((nk, M, p.tk), lambda j, k: (0, 0, 0)),
                # Weight tile from the (nj, nk, tk, tn) pre-tiled layout; the
                # two leading dims are squeezed, each step streams one
                # contiguous bf16 tile from HBM.
                pl.BlockSpec((None, None, p.tk, p.tn),
                             lambda j, k: (j, k, 0, 0), **w_spec_kwargs),
                # Bias tile (tiny).
                pl.BlockSpec((1, p.tn), lambda j, k: (0, j)),
            ],
            out_specs=pl.BlockSpec((M, p.tn), lambda j, k: (0, j)),
        ),
        compiler_params=pltpu.CompilerParams(
            # N tiles independent -> "parallel" (v7x megacore); K is the
            # reduction axis -> "arbitrary".
            dimension_semantics=("parallel", "arbitrary"),
            vmem_limit_bytes=vmem_limit_bytes,
        ),
    )(x3, p.w_tiles, p.b_pad)

    return out if p.n_pad == p.out_features else out[:, : p.out_features]


def large_model_forward(x, packed_params, **kwargs):
    p1, p2, p3, p4 = packed_params
    x = linear_pallas(x, p1, apply_relu=True, **kwargs)    # block1
    x = linear_pallas(x, p2, apply_relu=True, **kwargs)    # block2
    x = linear_pallas(x, p3, apply_relu=True, **kwargs)    # block3
    x = linear_pallas(x, p4, apply_relu=False, **kwargs)   # fc
    return x


def reference_forward(x, raw_params):
    """Pure-JAX reference implementing the SAME numerical algorithm as the
    kernel: bf16 weights and bf16 activations at each matmul, exact f32
    accumulation, f32 bias/ReLU epilogue."""
    hi = jax.lax.Precision.HIGHEST

    def layer(h, w_t, b, relu):
        hq = h.astype(jnp.bfloat16).astype(jnp.float32)
        wq = w_t.astype(jnp.bfloat16).astype(jnp.float32)
        y = jnp.dot(hq, wq, precision=hi) + b
        return jnp.maximum(y, 0.0) if relu else y

    (w1, b1), (w2, b2), (w3, b3), (w4, b4) = raw_params
    x = layer(x, w1, b1, True)
    x = layer(x, w2, b2, True)
    x = layer(x, w3, b3, True)
    return layer(x, w4, b4, False)


if __name__ == "__main__":
    # Small shapes consistent with the module's structure
    # (original: 16000 -> 10000 -> 10000 -> 10000 -> 16000). Deliberately NOT
    # multiples of 128 so the ragged-dim padding path is exercised.
    BATCH, IN_F, HID, OUT_F = 2, 1000, 600, 1000

    key = jax.random.PRNGKey(0)
    k_x, k1, k2, k3, k4 = jax.random.split(key, 5)

    x = jax.random.normal(k_x, (BATCH, IN_F), jnp.float32)
    raw_params = [
        init_linear_params(k1, IN_F, HID),
        init_linear_params(k2, HID, HID),
        init_linear_params(k3, HID, HID),
        init_linear_params(k4, HID, OUT_F),
    ]

    # ONE-TIME packing (padding / bf16 cast / per-tile repack) -- this is the
    # work that used to run inside every forward call.
    packed_big = [pack_linear_params(w, b, tk=2048, tn=2048)
                  for (w, b) in raw_params]
    # Small-tile packing so multi-step K/N grids (accumulator init/finalize,
    # resident-output revisit, squeezed weight-tile indexing) are exercised
    # even at these small test shapes.
    packed_small = [pack_linear_params(w, b, tk=256, tn=256)
                    for (w, b) in raw_params]

    y = jax.block_until_ready(large_model_forward(x, packed_big))
    y_small = jax.block_until_ready(large_model_forward(x, packed_small))
    y_ref = jax.block_until_ready(reference_forward(x, raw_params))

    assert y.shape == (BATCH, OUT_F), y.shape
    assert jnp.allclose(y, y_ref, rtol=2e-3, atol=2e-3), (
        "default-tile mismatch, max abs diff = %g"
        % float(jnp.max(jnp.abs(y - y_ref))))
    assert jnp.allclose(y_small, y_ref, rtol=2e-3, atol=2e-3), (
        "small-tile mismatch, max abs diff = %g"
        % float(jnp.max(jnp.abs(y_small - y_ref))))
    print("KERNEL_OK")
</pallas_src>

<mosaic_0001>
module attributes {stable_mosaic.version = 11 : i64} {
  func.func @_linear_kernel(%arg0: i32, %arg1: i32, %arg2: memref<1x2x1024xbf16, #tpu.memory_space<vmem>>, %arg3: memref<1x1x1024x640xbf16, #tpu.memory_space<vmem>>, %arg4: memref<1x640xf32, #tpu.memory_space<vmem>>, %arg5: memref<2x640xf32, #tpu.memory_space<vmem>>) attributes {dimension_semantics = [#tpu.dimension_semantics<parallel>, #tpu.dimension_semantics<arbitrary>], iteration_bounds = array<i64: 1, 1>, scalar_prefetch = 0 : i64, scratch_operands = 0 : i64, tpu.core_type = #tpu.core_type<tc>, window_params = [{pipeline_mode = #tpu.pipeline_mode<synchronous>, transform_indices = @transform_0, window_bounds = array<i64: 1, 2, 1024>}, {transform_indices = @transform_1, window_bounds = array<i64: 1, 1, 1024, 640>}, {transform_indices = @transform_2, window_bounds = array<i64: 1, 640>}, {transform_indices = @transform_3, window_bounds = array<i64: 2, 640>}]} {
    %c0_i32 = arith.constant 0 : i32
    %0 = arith.cmpi eq, %arg1, %c0_i32 : i32
    %1 = arith.extui %0 : i1 to i32
    %c0_i32_0 = arith.constant 0 : i32
    %2 = arith.cmpi ne, %1, %c0_i32_0 : i32
    scf.if %2 {
      %cst_12 = arith.constant 0.000000e+00 : f32
      %15 = vector.broadcast %cst_12 : f32 to vector<2x640xf32>
      %c0_13 = arith.constant 0 : index
      %c0_14 = arith.constant 0 : index
      %16 = vector.load %arg5[%c0_13, %c0_14] : memref<2x640xf32, #tpu.memory_space<vmem>>, vector<2x640xf32>
      tpu.vector_store %arg5[%c0_13, %c0_14], %15 {strides = array<i32>} : memref<2x640xf32, #tpu.memory_space<vmem>>, vector<2x640xf32>,
    } else {
    }
    %c0 = arith.constant 0 : index
    %c0_1 = arith.constant 0 : index
    %3 = vector.load %arg5[%c0, %c0_1] : memref<2x640xf32, #tpu.memory_space<vmem>>, vector<2x640xf32>
    %4 = arith.index_cast %arg1 : i32 to index
    %c0_2 = arith.constant 0 : index
    %c0_3 = arith.constant 0 : index
    %5 = vector.load %arg2[%4, %c0_2, %c0_3] : memref<1x2x1024xbf16, #tpu.memory_space<vmem>>, vector<1x2x1024xbf16>
    %6 = vector.shape_cast %5 : vector<1x2x1024xbf16> to vector<2x1024xbf16>
    %c0_4 = arith.constant 0 : index
    %c0_5 = arith.constant 0 : index
    %c0_6 = arith.constant 0 : index
    %c0_7 = arith.constant 0 : index
    %7 = vector.load %arg3[%c0_4, %c0_5, %c0_6, %c0_7] : memref<1x1x1024x640xbf16, #tpu.memory_space<vmem>>, vector<1x1x1024x640xbf16>
    %8 = vector.shape_cast %7 : vector<1x1x1024x640xbf16> to vector<1024x640xbf16>
    %cst = arith.constant dense<0.000000e+00> : vector<2x640xf32>
    %9 = tpu.matmul %6, %8, %cst {dimension_numbers = #tpu.dot_dimension_numbers<[1], [0], [0], [1], [0, 0, 1, 1], [], []>} : vector<2x1024xbf16>, vector<1024x640xbf16>, vector<2x640xf32> -> vector<2x640xf32>
    %10 = arith.addf %3, %9 : vector<2x640xf32>
    %c0_8 = arith.constant 0 : index
    %c0_9 = arith.constant 0 : index
    %11 = vector.load %arg5[%c0_8, %c0_9] : memref<2x640xf32, #tpu.memory_space<vmem>>, vector<2x640xf32>
    tpu.vector_store %arg5[%c0_8, %c0_9], %10 {strides = array<i32>} : memref<2x640xf32, #tpu.memory_space<vmem>>, vector<2x640xf32>,
    %c0_i32_10 = arith.constant 0 : i32
    %12 = arith.cmpi eq, %arg1, %c0_i32_10 : i32
    %13 = arith.extui %12 : i1 to i32
    %c0_i32_11 = arith.constant 0 : i32
    %14 = arith.cmpi ne, %13, %c0_i32_11 : i32
    scf.if %14 {
      %c0_12 = arith.constant 0 : index
      %c0_13 = arith.constant 0 : index
      %15 = vector.load %arg5[%c0_12, %c0_13] : memref<2x640xf32, #tpu.memory_space<vmem>>, vector<2x640xf32>
      %c0_14 = arith.constant 0 : index
      %c0_15 = arith.constant 0 : index
      %16 = vector.load %arg4[%c0_14, %c0_15] : memref<1x640xf32, #tpu.memory_space<vmem>>, vector<1x640xf32>
      %17 = vector.broadcast %16 : vector<1x640xf32> to vector<2x640xf32>
      %18 = arith.addf %15, %17 : vector<2x640xf32>
      %cst_16 = arith.constant 0.000000e+00 : f32
      %19 = vector.broadcast %cst_16 : f32 to vector<2x640xf32>
      %20 = arith.maximumf %18, %19 : vector<2x640xf32>
      %c0_17 = arith.constant 0 : index
      %c0_18 = arith.constant 0 : index
      %21 = vector.load %arg5[%c0_17, %c0_18] : memref<2x640xf32, #tpu.memory_space<vmem>>, vector<2x640xf32>
      tpu.vector_store %arg5[%c0_17, %c0_18], %20 {strides = array<i32>} : memref<2x640xf32, #tpu.memory_space<vmem>>, vector<2x640xf32>,
    } else {
    }
    return
  }
  func.func @transform_0(%arg0: i32, %arg1: i32) -> (i32, i32, i32) {
    %c0_i32 = arith.constant 0 : i32
    %c0_i32_0 = arith.constant 0 : i32
    %c0_i32_1 = arith.constant 0 : i32
    %c0_i32_2 = arith.constant 0 : i32
    return %c0_i32, %c0_i32_0, %c0_i32_1 : i32, i32, i32
  }
  func.func @transform_1(%arg0: i32, %arg1: i32) -> (i32, i32, i32, i32) {
    %c0_i32 = arith.constant 0 : i32
    %c0_i32_0 = arith.constant 0 : i32
    %c0_i32_1 = arith.constant 0 : i32
    return %arg0, %arg1, %c0_i32, %c0_i32_0 : i32, i32, i32, i32
  }
  func.func @transform_2(%arg0: i32, %arg1: i32) -> (i32, i32) {
    %c0_i32 = arith.constant 0 : i32
    %c0_i32_0 = arith.constant 0 : i32
    return %c0_i32, %arg0 : i32, i32
  }
  func.func @transform_3(%arg0: i32, %arg1: i32) -> (i32, i32) {
    %c0_i32 = arith.constant 0 : i32
    %c0_i32_0 = arith.constant 0 : i32
    return %c0_i32, %arg0 : i32, i32
  }
}

</mosaic_0001>

<llo_original>
// kernel: tpu_custom_call.1
$region0: #{tpu_custom_call.1}
  #allocation0 [shape = 'u32[]', space=smem, size = 0x4, offset = 0x4, fixed_abs, tag = 'smem constant byte address 0x4 - core index']
  #allocation1 [shape = 'u32[72,128]{1,0:T(1,128)}', space=vmem, size = 0x9000, scoped, tag = 'internal scratch']
  %s0 = inlined_call_operand.hbm [shape: bf16[1,2,1024], index: 0, kind: input, shape index: {}]
  %s1 = inlined_call_operand.hbm [shape: bf16[1,1,1024,640], index: 1, kind: input, shape index: {}]
  %s2 = inlined_call_operand.hbm [shape: f32[1,640], index: 2, kind: input, shape index: {}]
  %s3 = inlined_call_operand.hbm [shape: f32[2,640], index: 3, kind: output, shape index: {}]
  %s4 = sld [smem:[#allocation0]]
  $region42: #{tpu_custom_call.1} parent=0
    _
  %s6 = ssub.s32 1, %s4
  %s7 = scalar_select 0, %s6, %s4
  $region1: #{tpu_custom_call.1} parent=0
    #allocation2 [shape = 'u8[4096]{0}', space=vmem, size = 0x1000, scoped, tag = 'input window, operand 0, single buffered']
    #allocation3 [shape = 's32[1]{0}', space=sflag, size = 0x4, scoped, tag = 'scoped memory for tpu_custom_call.1']
    #allocation4 [shape = 's32[1]{0}', space=sflag, size = 0x4, scoped, tag = 'scoped memory for tpu_custom_call.1']
    #allocation5 [shape = 'u8[1310720]{0}', space=vmem, size = 0x140000, scoped, tag = 'input window, operand 1, single buffered']
    #allocation6 [shape = 's32[1]{0}', space=sflag, size = 0x4, scoped, tag = 'scoped memory for tpu_custom_call.1']
    #allocation7 [shape = 'u8[2560]{0}', space=vmem, size = 0xc00, scoped, tag = 'input window, operand 2, single buffered']
    #allocation8 [shape = 'u8[5120]{0}', space=vmem, size = 0x1400, scoped, tag = 'output window, operand 0, single buffered']
    %8 = vsyncpa [#allocation3], 0
    %9 = vsyncpa [#allocation6], 0
    %10 = vsyncpa [#allocation4], 0
    // Predicated region
    $region2: #{tpu_custom_call.1} parent=1 // pred_check
      _
    $region3: #{tpu_custom_call.1} parent=1 // pred_check_branch
      %12 = sbr.rel (0) target = $region5
    $region4: #{tpu_custom_call.1} parent=1 // pred_region
      %14 = vsyncadd [#allocation3], 0
      %s16 = sshll.u32 %s0, 4
      %s17 = int_to_ptr.hbm [resolvable:$true] %s16
      %s18 = sshll.u32 [#allocation2], 4
      %s19 = int_to_ptr.vmem [resolvable:$true] %s18
      %21 = dma.hbm_to_vmem [thread:$0]  %s17, 128, %s19, [#allocation3]
    $region5: #{tpu_custom_call.1} parent=1 // pred_fallthru
      _
    // Predicated region
    $region6: #{tpu_custom_call.1} parent=1 // pred_check
      _
    $region7: #{tpu_custom_call.1} parent=1 // pred_check_branch
      %23 = sbr.rel (0) target = $region9
    $region8: #{tpu_custom_call.1} parent=1 // pred_region
      %25 = vsyncadd [#allocation6], 0
      %s26 = sshll.u32 %s1, 4
      %s27 = int_to_ptr.hbm [resolvable:$true] %s26
      %s28 = sshll.u32 [#allocation5], 4
      %s29 = int_to_ptr.vmem [resolvable:$true] %s28
      %34 = dma.hbm_to_vmem [thread:$0]  %s27, 40960, %s29, [#allocation6], 320, 320, 20
    $region9: #{tpu_custom_call.1} parent=1 // pred_fallthru
      _
    // Predicated region
    $region10: #{tpu_custom_call.1} parent=1 // pred_check
      _
    $region11: #{tpu_custom_call.1} parent=1 // pred_check_branch
      %36 = sbr.rel (0) target = $region13
    $region12: #{tpu_custom_call.1} parent=1 // pred_region
      %38 = vsyncadd [#allocation6], 0
      %s40 = sshll.u32 %s2, 4
      %s41 = int_to_ptr.hbm [resolvable:$true] %s40
      %s42 = sshll.u32 [#allocation7], 4
      %s43 = int_to_ptr.vmem [resolvable:$true] %s42
      %45 = dma.hbm_to_vmem [thread:$0]  %s41, 80, %s43, [#allocation6]
    $region13: #{tpu_custom_call.1} parent=1 // pred_fallthru
      _
    // Predicated region
    $region14: #{tpu_custom_call.1} parent=1 // pred_check
      _
    $region15: #{tpu_custom_call.1} parent=1 // pred_check_branch
      %47 = sbr.rel (0) target = $region17
    $region16: #{tpu_custom_call.1} parent=1 // pred_region
      %49 = dma.done [#allocation3], 128
    $region17: #{tpu_custom_call.1} parent=1 // pred_fallthru
      _
    // Predicated region
    $region18: #{tpu_custom_call.1} parent=1 // pred_check
      _
    $region19: #{tpu_custom_call.1} parent=1 // pred_check_branch
      %51 = sbr.rel (0) target = $region21
    $region20: #{tpu_custom_call.1} parent=1 // pred_region
      %53 = dma.done [#allocation6], 40960
    $region21: #{tpu_custom_call.1} parent=1 // pred_fallthru
      _
    // Predicated region
    $region22: #{tpu_custom_call.1} parent=1 // pred_check
      _
    $region23: #{tpu_custom_call.1} parent=1 // pred_check_branch
      %55 = sbr.rel (0) target = $region25
    $region24: #{tpu_custom_call.1} parent=1 // pred_region
      %57 = dma.done [#allocation6], 80
    $region25: #{tpu_custom_call.1} parent=1 // pred_fallthru
      _
    %p58 = scmp.eq.s32.totalorder 0, 0
    // Predicated region
    $region26: #{tpu_custom_call.1} parent=1 // pred_check
      %p59 = pneg %p58
    $region27: #{tpu_custom_call.1} parent=1 // pred_check_branch
      %61 = sbr.rel (%p59) target = $region29
    $region28: #{tpu_custom_call.1} parent=1 // pred_region
      %62 = vst [vmem:[#allocation8] sm:$0xff] 0.0
      %63 = vst [vmem:[#allocation8 + $0x8] sm:$0x3] 0.0
    $region29: #{tpu_custom_call.1} parent=1 // pred_fallthru
      _
    %v64 = vld [vmem:[#allocation8] sm:$0xff]
    %v65 = vld [vmem:[#allocation8 + $0x8] sm:$0x3]
    %s66 = smul.u32 0, 8
    %s67 = scalar_lea.vmem [#allocation2], %s66
    %v68 = vld [vmem:[%s67] sm:$0xff]
    %v69 = vld [vmem:[#allocation5] sm:$0xff]
    %v70 = vld [vmem:[#allocation5 + $0x8] sm:$0xff]
    %v71 = vld [vmem:[#allocation5 + $0x10] sm:$0xf]
    %v72 = vld [vmem:[#allocation5 + $0x14] sm:$0xff]
    %v73 = vld [vmem:[#allocation5 + $0x1c] sm:$0xff]
    %v74 = vld [vmem:[#allocation5 + $0x24] sm:$0xf]
    %v75 = vld [vmem:[#allocation5 + $0x28] sm:$0xff]
    %v76 = vld [vmem:[#allocation5 + $0x30] sm:$0xff]
    %v77 = vld [vmem:[#allocation5 + $0x38] sm:$0xf]
    %v78 = vld [vmem:[#allocation5 + $0x3c] sm:$0xff]
    %v79 = vld [vmem:[#allocation5 + $0x44] sm:$0xff]
    %v80 = vld [vmem:[#allocation5 + $0x4c] sm:$0xf]
    %v81 = vld [vmem:[#allocation5 + $0x50] sm:$0xff]
    %v82 = vld [vmem:[#allocation5 + $0x58] sm:$0xff]
    %v83 = vld [vmem:[#allocation5 + $0x60] sm:$0xf]
    %v84 = vld [vmem:[#allocation5 + $0x64] sm:$0xff]
    %v85 = vld [vmem:[#allocation5 + $0x6c] sm:$0xff]
    %v86 = vld [vmem:[#allocation5 + $0x74] sm:$0xf]
    %v87 = vld [vmem:[#allocation5 + $0x78] sm:$0xff]
    %v88 = vld [vmem:[#allocation5 + $0x80] sm:$0xff]
    %v89 = vld [vmem:[#allocation5 + $0x88] sm:$0xf]
    %v90 = vld [vmem:[#allocation5 + $0x8c] sm:$0xff]
    %v91 = vld [vmem:[#allocation5 + $0x94] sm:$0xff]
    %v92 = vld [vmem:[#allocation5 + $0x9c] sm:$0xf]
    %v93 = vld [vmem:[#allocation5 + $0xa0] sm:$0xff]
    %v94 = vld [vmem:[#allocation5 + $0xa8] sm:$0xff]
    %v95 = vld [vmem:[#allocation5 + $0xb0] sm:$0xf]
    %v96 = vld [vmem:[#allocation5 + $0xb4] sm:$0xff]
    %v97 = vld [vmem:[#allocation5 + $0xbc] sm:$0xff]
    %v98 = vld [vmem:[#allocation5 + $0xc4] sm:$0xf]
    %v99 = vld [vmem:[#allocation5 + $0xc8] sm:$0xff]
    %v100 = vld [vmem:[#allocation5 + $0xd0] sm:$0xff]
    %v101 = vld [vmem:[#allocation5 + $0xd8] sm:$0xf]
    %v102 = vld [vmem:[#allocation5 + $0xdc] sm:$0xff]
    %v103 = vld [vmem:[#allocation5 + $0xe4] sm:$0xff]
    %v104 = vld [vmem:[#allocation5 + $0xec] sm:$0xf]
    %v105 = vld [vmem:[#allocation5 + $0xf0] sm:$0xff]
    %v106 = vld [vmem:[#allocation5 + $0xf8] sm:$0xff]
    %v107 = vld [vmem:[#allocation5 + $0x100] sm:$0xf]
    %v108 = vld [vmem:[#allocation5 + $0x104] sm:$0xff]
    %v109 = vld [vmem:[#allocation5 + $0x10c] sm:$0xff]
    %v110 = vld [vmem:[#allocation5 + $0x114] sm:$0xf]
    %v111 = vld [vmem:[#allocation5 + $0x118] sm:$0xff]
    %v112 = vld [vmem:[#allocation5 + $0x120] sm:$0xff]
    %v113 = vld [vmem:[#allocation5 + $0x128] sm:$0xf]
    %v114 = vld [vmem:[#allocation5 + $0x12c] sm:$0xff]
    %v115 = vld [vmem:[#allocation5 + $0x134] sm:$0xff]
    %v116 = vld [vmem:[#allocation5 + $0x13c] sm:$0xf]
    %v117 = vld [vmem:[#allocation5 + $0x140] sm:$0xff]
    %v118 = vld [vmem:[#allocation5 + $0x148] sm:$0xff]
    %v119 = vld [vmem:[#allocation5 + $0x150] sm:$0xf]
    %v120 = vld [vmem:[#allocation5 + $0x154] sm:$0xff]
    %v121 = vld [vmem:[#allocation5 + $0x15c] sm:$0xff]
    %v122 = vld [vmem:[#allocation5 + $0x164] sm:$0xf]
    %v123 = vld [vmem:[#allocation5 + $0x168] sm:$0xff]
    %v124 = vld [vmem:[#allocation5 + $0x170] sm:$0xff]
    %v125 = vld [vmem:[#allocation5 + $0x178] sm:$0xf]
    %v126 = vld [vmem:[#allocation5 + $0x17c] sm:$0xff]
    %v127 = vld [vmem:[#allocation5 + $0x184] sm:$0xff]
    %v128 = vld [vmem:[#allocation5 + $0x18c] sm:$0xf]
    %v129 = vld [vmem:[#allocation5 + $0x190] sm:$0xff]
    %v130 = vld [vmem:[#allocation5 + $0x198] sm:$0xff]
    %v131 = vld [vmem:[#allocation5 + $0x1a0] sm:$0xf]
    %v132 = vld [vmem:[#allocation5 + $0x1a4] sm:$0xff]
    %v133 = vld [vmem:[#allocation5 + $0x1ac] sm:$0xff]
    %v134 = vld [vmem:[#allocation5 + $0x1b4] sm:$0xf]
    %v135 = vld [vmem:[#allocation5 + $0x1b8] sm:$0xff]
    %v136 = vld [vmem:[#allocation5 + $0x1c0] sm:$0xff]
    %v137 = vld [vmem:[#allocation5 + $0x1c8] sm:$0xf]
    %v138 = vld [vmem:[#allocation5 + $0x1cc] sm:$0xff]
    %v139 = vld [vmem:[#allocation5 + $0x1d4] sm:$0xff]
    %v140 = vld [vmem:[#allocation5 + $0x1dc] sm:$0xf]
    %v141 = vld [vmem:[#allocation5 + $0x1e0] sm:$0xff]
    %v142 = vld [vmem:[#allocation5 + $0x1e8] sm:$0xff]
    %v143 = vld [vmem:[#allocation5 + $0x1f0] sm:$0xf]
    %v144 = vld [vmem:[#allocation5 + $0x1f4] sm:$0xff]
    %v145 = vld [vmem:[#allocation5 + $0x1fc] sm:$0xff]
    %v146 = vld [vmem:[#allocation5 + $0x204] sm:$0xf]
    %v147 = vld [vmem:[#allocation5 + $0x208] sm:$0xff]
    %v148 = vld [vmem:[#allocation5 + $0x210] sm:$0xff]
    %v149 = vld [vmem:[#allocation5 + $0x218] sm:$0xf]
    %v150 = vld [vmem:[#allocation5 + $0x21c] sm:$0xff]
    %v151 = vld [vmem:[#allocation5 + $0x224] sm:$0xff]
    %v152 = vld [vmem:[#allocation5 + $0x22c] sm:$0xf]
    %v153 = vld [vmem:[#allocation5 + $0x230] sm:$0xff]
    %v154 = vld [vmem:[#allocation5 + $0x238] sm:$0xff]
    %v155 = vld [vmem:[#allocation5 + $0x240] sm:$0xf]
    %v156 = vld [vmem:[#allocation5 + $0x244] sm:$0xff]
    %v157 = vld [vmem:[#allocation5 + $0x24c] sm:$0xff]
    %v158 = vld [vmem:[#allocation5 + $0x254] sm:$0xf]
    %v159 = vld [vmem:[#allocation5 + $0x258] sm:$0xff]
    %v160 = vld [vmem:[#allocation5 + $0x260] sm:$0xff]
    %v161 = vld [vmem:[#allocation5 + $0x268] sm:$0xf]
    %v162 = vld [vmem:[#allocation5 + $0x26c] sm:$0xff]
    %v163 = vld [vmem:[#allocation5 + $0x274] sm:$0xff]
    %v164 = vld [vmem:[#allocation5 + $0x27c] sm:$0xf]
    %v165 = vld [vmem:[#allocation5 + $0x280] sm:$0xff]
    %v166 = vld [vmem:[#allocation5 + $0x288] sm:$0xff]
    %v167 = vld [vmem:[#allocation5 + $0x290] sm:$0xf]
    %v168 = vld [vmem:[#allocation5 + $0x294] sm:$0xff]
    %v169 = vld [vmem:[#allocation5 + $0x29c] sm:$0xff]
    %v170 = vld [vmem:[#allocation5 + $0x2a4] sm:$0xf]
    %v171 = vld [vmem:[#allocation5 + $0x2a8] sm:$0xff]
    %v172 = vld [vmem:[#allocation5 + $0x2b0] sm:$0xff]
    %v173 = vld [vmem:[#allocation5 + $0x2b8] sm:$0xf]
    %v174 = vld [vmem:[#allocation5 + $0x2bc] sm:$0xff]
    %v175 = vld [vmem:[#allocation5 + $0x2c4] sm:$0xff]
    %v176 = vld [vmem:[#allocation5 + $0x2cc] sm:$0xf]
    %v177 = vld [vmem:[#allocation5 + $0x2d0] sm:$0xff]
    %v178 = vld [vmem:[#allocation5 + $0x2d8] sm:$0xff]
    %v179 = vld [vmem:[#allocation5 + $0x2e0] sm:$0xf]
    %v180 = vld [vmem:[#allocation5 + $0x2e4] sm:$0xff]
    %v181 = vld [vmem:[#allocation5 + $0x2ec] sm:$0xff]
    %v182 = vld [vmem:[#allocation5 + $0x2f4] sm:$0xf]
    %v183 = vld [vmem:[#allocation5 + $0x2f8] sm:$0xff]
    %v184 = vld [vmem:[#allocation5 + $0x300] sm:$0xff]
    %v185 = vld [vmem:[#allocation5 + $0x308] sm:$0xf]
    %v186 = vld [vmem:[#allocation5 + $0x30c] sm:$0xff]
    %v187 = vld [vmem:[#allocation5 + $0x314] sm:$0xff]
    %v188 = vld [vmem:[#allocation5 + $0x31c] sm:$0xf]
    %v189 = vld [vmem:[#allocation5 + $0x320] sm:$0xff]
    %v190 = vld [vmem:[#allocation5 + $0x328] sm:$0xff]
    %v191 = vld [vmem:[#allocation5 + $0x330] sm:$0xf]
    %v192 = vld [vmem:[#allocation5 + $0x334] sm:$0xff]
    %v193 = vld [vmem:[#allocation5 + $0x33c] sm:$0xff]
    %v194 = vld [vmem:[#allocation5 + $0x344] sm:$0xf]
    %v195 = vld [vmem:[#allocation5 + $0x348] sm:$0xff]
    %v196 = vld [vmem:[#allocation5 + $0x350] sm:$0xff]
    %v197 = vld [vmem:[#allocation5 + $0x358] sm:$0xf]
    %v198 = vld [vmem:[#allocation5 + $0x35c] sm:$0xff]
    %v199 = vld [vmem:[#allocation5 + $0x364] sm:$0xff]
    %v200 = vld [vmem:[#allocation5 + $0x36c] sm:$0xf]
    %v201 = vld [vmem:[#allocation5 + $0x370] sm:$0xff]
    %v202 = vld [vmem:[#allocation5 + $0x378] sm:$0xff]
    %v203 = vld [vmem:[#allocation5 + $0x380] sm:$0xf]
    %v204 = vld [vmem:[#allocation5 + $0x384] sm:$0xff]
    %v205 = vld [vmem:[#allocation5 + $0x38c] sm:$0xff]
    %v206 = vld [vmem:[#allocation5 + $0x394] sm:$0xf]
    %v207 = vld [vmem:[#allocation5 + $0x398] sm:$0xff]
    %v208 = vld [vmem:[#allocation5 + $0x3a0] sm:$0xff]
    %v209 = vld [vmem:[#allocation5 + $0x3a8] sm:$0xf]
    %v210 = vld [vmem:[#allocation5 + $0x3ac] sm:$0xff]
    %v211 = vld [vmem:[#allocation5 + $0x3b4] sm:$0xff]
    %v212 = vld [vmem:[#allocation5 + $0x3bc] sm:$0xf]
    %v213 = vld [vmem:[#allocation5 + $0x3c0] sm:$0xff]
    %v214 = vld [vmem:[#allocation5 + $0x3c8] sm:$0xff]
    %v215 = vld [vmem:[#allocation5 + $0x3d0] sm:$0xf]
    %v216 = vld [vmem:[#allocation5 + $0x3d4] sm:$0xff]
    %v217 = vld [vmem:[#allocation5 + $0x3dc] sm:$0xff]
    %v218 = vld [vmem:[#allocation5 + $0x3e4] sm:$0xf]
    %v219 = vld [vmem:[#allocation5 + $0x3e8] sm:$0xff]
    %v220 = vld [vmem:[#allocation5 + $0x3f0] sm:$0xff]
    %v221 = vld [vmem:[#allocation5 + $0x3f8] sm:$0xf]
    %v222 = vld [vmem:[#allocation5 + $0x3fc] sm:$0xff]
    %v223 = vld [vmem:[#allocation5 + $0x404] sm:$0xff]
    %v224 = vld [vmem:[#allocation5 + $0x40c] sm:$0xf]
    %v225 = vld [vmem:[#allocation5 + $0x410] sm:$0xff]
    %v226 = vld [vmem:[#allocation5 + $0x418] sm:$0xff]
    %v227 = vld [vmem:[#allocation5 + $0x420] sm:$0xf]
    %v228 = vld [vmem:[#allocation5 + $0x424] sm:$0xff]
    %v229 = vld [vmem:[#allocation5 + $0x42c] sm:$0xff]
    %v230 = vld [vmem:[#allocation5 + $0x434] sm:$0xf]
    %v231 = vld [vmem:[#allocation5 + $0x438] sm:$0xff]
    %v232 = vld [vmem:[#allocation5 + $0x440] sm:$0xff]
    %v233 = vld [vmem:[#allocation5 + $0x448] sm:$0xf]
    %v234 = vld [vmem:[#allocation5 + $0x44c] sm:$0xff]
    %v235 = vld [vmem:[#allocation5 + $0x454] sm:$0xff]
    %v236 = vld [vmem:[#allocation5 + $0x45c] sm:$0xf]
    %v237 = vld [vmem:[#allocation5 + $0x460] sm:$0xff]
    %v238 = vld [vmem:[#allocation5 + $0x468] sm:$0xff]
    %v239 = vld [vmem:[#allocation5 + $0x470] sm:$0xf]
    %v240 = vld [vmem:[#allocation5 + $0x474] sm:$0xff]
    %v241 = vld [vmem:[#allocation5 + $0x47c] sm:$0xff]
    %v242 = vld [vmem:[#allocation5 + $0x484] sm:$0xf]
    %v243 = vld [vmem:[#allocation5 + $0x488] sm:$0xff]
    %v244 = vld [vmem:[#allocation5 + $0x490] sm:$0xff]
    %v245 = vld [vmem:[#allocation5 + $0x498] sm:$0xf]
    %v246 = vld [vmem:[#allocation5 + $0x49c] sm:$0xff]
    %v247 = vld [vmem:[#allocation5 + $0x4a4] sm:$0xff]
    %v248 = vld [vmem:[#allocation5 + $0x4ac] sm:$0xf]
    %v249 = vld [vmem:[#allocation5 + $0x4b0] sm:$0xff]
    %v250 = vld [vmem:[#allocation5 + $0x4b8] sm:$0xff]
    %v251 = vld [vmem:[#allocation5 + $0x4c0] sm:$0xf]
    %v252 = vld [vmem:[#allocation5 + $0x4c4] sm:$0xff]
    %v253 = vld [vmem:[#allocation5 + $0x4cc] sm:$0xff]
    %v254 = vld [vmem:[#allocation5 + $0x4d4] sm:$0xf]
    %v255 = vld [vmem:[#allocation5 + $0x4d8] sm:$0xff]
    %v256 = vld [vmem:[#allocation5 + $0x4e0] sm:$0xff]
    %v257 = vld [vmem:[#allocation5 + $0x4e8] sm:$0xf]
    %v258 = vld [vmem:[#allocation5 + $0x4ec] sm:$0xff]
    %v259 = vld [vmem:[#allocation5 + $0x4f4] sm:$0xff]
    %v260 = vld [vmem:[#allocation5 + $0x4fc] sm:$0xf]
    %v261 = vld [vmem:[#allocation5 + $0x500] sm:$0xff]
    %v262 = vld [vmem:[#allocation5 + $0x508] sm:$0xff]
    %v263 = vld [vmem:[#allocation5 + $0x510] sm:$0xf]
    %v264 = vld [vmem:[#allocation5 + $0x514] sm:$0xff]
    %v265 = vld [vmem:[#allocation5 + $0x51c] sm:$0xff]
    %v266 = vld [vmem:[#allocation5 + $0x524] sm:$0xf]
    %v267 = vld [vmem:[#allocation5 + $0x528] sm:$0xff]
    %v268 = vld [vmem:[#allocation5 + $0x530] sm:$0xff]
    %v269 = vld [vmem:[#allocation5 + $0x538] sm:$0xf]
    %v270 = vld [vmem:[#allocation5 + $0x53c] sm:$0xff]
    %v271 = vld [vmem:[#allocation5 + $0x544] sm:$0xff]
    %v272 = vld [vmem:[#allocation5 + $0x54c] sm:$0xf]
    %v273 = vld [vmem:[#allocation5 + $0x550] sm:$0xff]
    %v274 = vld [vmem:[#allocation5 + $0x558] sm:$0xff]
    %v275 = vld [vmem:[#allocation5 + $0x560] sm:$0xf]
    %v276 = vld [vmem:[#allocation5 + $0x564] sm:$0xff]
    %v277 = vld [vmem:[#allocation5 + $0x56c] sm:$0xff]
    %v278 = vld [vmem:[#allocation5 + $0x574] sm:$0xf]
    %v279 = vld [vmem:[#allocation5 + $0x578] sm:$0xff]
    %v280 = vld [vmem:[#allocation5 + $0x580] sm:$0xff]
    %v281 = vld [vmem:[#allocation5 + $0x588] sm:$0xf]
    %v282 = vld [vmem:[#allocation5 + $0x58c] sm:$0xff]
    %v283 = vld [vmem:[#allocation5 + $0x594] sm:$0xff]
    %v284 = vld [vmem:[#allocation5 + $0x59c] sm:$0xf]
    %v285 = vld [vmem:[#allocation5 + $0x5a0] sm:$0xff]
    %v286 = vld [vmem:[#allocation5 + $0x5a8] sm:$0xff]
    %v287 = vld [vmem:[#allocation5 + $0x5b0] sm:$0xf]
    %v288 = vld [vmem:[#allocation5 + $0x5b4] sm:$0xff]
    %v289 = vld [vmem:[#allocation5 + $0x5bc] sm:$0xff]
    %v290 = vld [vmem:[#allocation5 + $0x5c4] sm:$0xf]
    %v291 = vld [vmem:[#allocation5 + $0x5c8] sm:$0xff]
    %v292 = vld [vmem:[#allocation5 + $0x5d0] sm:$0xff]
    %v293 = vld [vmem:[#allocation5 + $0x5d8] sm:$0xf]
    %v294 = vld [vmem:[#allocation5 + $0x5dc] sm:$0xff]
    %v295 = vld [vmem:[#allocation5 + $0x5e4] sm:$0xff]
    %v296 = vld [vmem:[#allocation5 + $0x5ec] sm:$0xf]
    %v297 = vld [vmem:[#allocation5 + $0x5f0] sm:$0xff]
    %v298 = vld [vmem:[#allocation5 + $0x5f8] sm:$0xff]
    %v299 = vld [vmem:[#allocation5 + $0x600] sm:$0xf]
    %v300 = vld [vmem:[#allocation5 + $0x604] sm:$0xff]
    %v301 = vld [vmem:[#allocation5 + $0x60c] sm:$0xff]
    %v302 = vld [vmem:[#allocation5 + $0x614] sm:$0xf]
    %v303 = vld [vmem:[#allocation5 + $0x618] sm:$0xff]
    %v304 = vld [vmem:[#allocation5 + $0x620] sm:$0xff]
    %v305 = vld [vmem:[#allocation5 + $0x628] sm:$0xf]
    %v306 = vld [vmem:[#allocation5 + $0x62c] sm:$0xff]
    %v307 = vld [vmem:[#allocation5 + $0x634] sm:$0xff]
    %v308 = vld [vmem:[#allocation5 + $0x63c] sm:$0xf]
    %v309 = vld [vmem:[#allocation5 + $0x640] sm:$0xff]
    %v310 = vld [vmem:[#allocation5 + $0x648] sm:$0xff]
    %v311 = vld [vmem:[#allocation5 + $0x650] sm:$0xf]
    %v312 = vld [vmem:[#allocation5 + $0x654] sm:$0xff]
    %v313 = vld [vmem:[#allocation5 + $0x65c] sm:$0xff]
    %v314 = vld [vmem:[#allocation5 + $0x664] sm:$0xf]
    %v315 = vld [vmem:[#allocation5 + $0x668] sm:$0xff]
    %v316 = vld [vmem:[#allocation5 + $0x670] sm:$0xff]
    %v317 = vld [vmem:[#allocation5 + $0x678] sm:$0xf]
    %v318 = vld [vmem:[#allocation5 + $0x67c] sm:$0xff]
    %v319 = vld [vmem:[#allocation5 + $0x684] sm:$0xff]
    %v320 = vld [vmem:[#allocation5 + $0x68c] sm:$0xf]
    %v321 = vld [vmem:[#allocation5 + $0x690] sm:$0xff]
    %v322 = vld [vmem:[#allocation5 + $0x698] sm:$0xff]
    %v323 = vld [vmem:[#allocation5 + $0x6a0] sm:$0xf]
    %v324 = vld [vmem:[#allocation5 + $0x6a4] sm:$0xff]
    %v325 = vld [vmem:[#allocation5 + $0x6ac] sm:$0xff]
    %v326 = vld [vmem:[#allocation5 + $0x6b4] sm:$0xf]
    %v327 = vld [vmem:[#allocation5 + $0x6b8] sm:$0xff]
    %v328 = vld [vmem:[#allocation5 + $0x6c0] sm:$0xff]
    %v329 = vld [vmem:[#allocation5 + $0x6c8] sm:$0xf]
    %v330 = vld [vmem:[#allocation5 + $0x6cc] sm:$0xff]
    %v331 = vld [vmem:[#allocation5 + $0x6d4] sm:$0xff]
    %v332 = vld [vmem:[#allocation5 + $0x6dc] sm:$0xf]
    %v333 = vld [vmem:[#allocation5 + $0x6e0] sm:$0xff]
    %v334 = vld [vmem:[#allocation5 + $0x6e8] sm:$0xff]
    %v335 = vld [vmem:[#allocation5 + $0x6f0] sm:$0xf]
    %v336 = vld [vmem:[#allocation5 + $0x6f4] sm:$0xff]
    %v337 = vld [vmem:[#allocation5 + $0x6fc] sm:$0xff]
    %v338 = vld [vmem:[#allocation5 + $0x704] sm:$0xf]
    %v339 = vld [vmem:[#allocation5 + $0x708] sm:$0xff]
    %v340 = vld [vmem:[#allocation5 + $0x710] sm:$0xff]
    %v341 = vld [vmem:[#allocation5 + $0x718] sm:$0xf]
    %v342 = vld [vmem:[#allocation5 + $0x71c] sm:$0xff]
    %v343 = vld [vmem:[#allocation5 + $0x724] sm:$0xff]
    %v344 = vld [vmem:[#allocation5 + $0x72c] sm:$0xf]
    %v345 = vld [vmem:[#allocation5 + $0x730] sm:$0xff]
    %v346 = vld [vmem:[#allocation5 + $0x738] sm:$0xff]
    %v347 = vld [vmem:[#allocation5 + $0x740] sm:$0xf]
    %v348 = vld [vmem:[#allocation5 + $0x744] sm:$0xff]
    %v349 = vld [vmem:[#allocation5 + $0x74c] sm:$0xff]
    %v350 = vld [vmem:[#allocation5 + $0x754] sm:$0xf]
    %v351 = vld [vmem:[#allocation5 + $0x758] sm:$0xff]
    %v352 = vld [vmem:[#allocation5 + $0x760] sm:$0xff]
    %v353 = vld [vmem:[#allocation5 + $0x768] sm:$0xf]
    %v354 = vld [vmem:[#allocation5 + $0x76c] sm:$0xff]
    %v355 = vld [vmem:[#allocation5 + $0x774] sm:$0xff]
    %v356 = vld [vmem:[#allocation5 + $0x77c] sm:$0xf]
    %v357 = vld [vmem:[#allocation5 + $0x780] sm:$0xff]
    %v358 = vld [vmem:[#allocation5 + $0x788] sm:$0xff]
    %v359 = vld [vmem:[#allocation5 + $0x790] sm:$0xf]
    %v360 = vld [vmem:[#allocation5 + $0x794] sm:$0xff]
    %v361 = vld [vmem:[#allocation5 + $0x79c] sm:$0xff]
    %v362 = vld [vmem:[#allocation5 + $0x7a4] sm:$0xf]
    %v363 = vld [vmem:[#allocation5 + $0x7a8] sm:$0xff]
    %v364 = vld [vmem:[#allocation5 + $0x7b0] sm:$0xff]
    %v365 = vld [vmem:[#allocation5 + $0x7b8] sm:$0xf]
    %v366 = vld [vmem:[#allocation5 + $0x7bc] sm:$0xff]
    %v367 = vld [vmem:[#allocation5 + $0x7c4] sm:$0xff]
    %v368 = vld [vmem:[#allocation5 + $0x7cc] sm:$0xf]
    %v369 = vld [vmem:[#allocation5 + $0x7d0] sm:$0xff]
    %v370 = vld [vmem:[#allocation5 + $0x7d8] sm:$0xff]
    %v371 = vld [vmem:[#allocation5 + $0x7e0] sm:$0xf]
    %v372 = vld [vmem:[#allocation5 + $0x7e4] sm:$0xff]
    %v373 = vld [vmem:[#allocation5 + $0x7ec] sm:$0xff]
    %v374 = vld [vmem:[#allocation5 + $0x7f4] sm:$0xf]
    %v375 = vld [vmem:[#allocation5 + $0x7f8] sm:$0xff]
    %v376 = vld [vmem:[#allocation5 + $0x800] sm:$0xff]
    %v377 = vld [vmem:[#allocation5 + $0x808] sm:$0xf]
    %v378 = vld [vmem:[#allocation5 + $0x80c] sm:$0xff]
    %v379 = vld [vmem:[#allocation5 + $0x814] sm:$0xff]
    %v380 = vld [vmem:[#allocation5 + $0x81c] sm:$0xf]
    %v381 = vld [vmem:[#allocation5 + $0x820] sm:$0xff]
    %v382 = vld [vmem:[#allocation5 + $0x828] sm:$0xff]
    %v383 = vld [vmem:[#allocation5 + $0x830] sm:$0xf]
    %v384 = vld [vmem:[#allocation5 + $0x834] sm:$0xff]
    %v385 = vld [vmem:[#allocation5 + $0x83c] sm:$0xff]
    %v386 = vld [vmem:[#allocation5 + $0x844] sm:$0xf]
    %v387 = vld [vmem:[#allocation5 + $0x848] sm:$0xff]
    %v388 = vld [vmem:[#allocation5 + $0x850] sm:$0xff]
    %v389 = vld [vmem:[#allocation5 + $0x858] sm:$0xf]
    %v390 = vld [vmem:[#allocation5 + $0x85c] sm:$0xff]
    %v391 = vld [vmem:[#allocation5 + $0x864] sm:$0xff]
    %v392 = vld [vmem:[#allocation5 + $0x86c] sm:$0xf]
    %v393 = vld [vmem:[#allocation5 + $0x870] sm:$0xff]
    %v394 = vld [vmem:[#allocation5 + $0x878] sm:$0xff]
    %v395 = vld [vmem:[#allocation5 + $0x880] sm:$0xf]
    %v396 = vld [vmem:[#allocation5 + $0x884] sm:$0xff]
    %v397 = vld [vmem:[#allocation5 + $0x88c] sm:$0xff]
    %v398 = vld [vmem:[#allocation5 + $0x894] sm:$0xf]
    %v399 = vld [vmem:[#allocation5 + $0x898] sm:$0xff]
    %v400 = vld [vmem:[#allocation5 + $0x8a0] sm:$0xff]
    %v401 = vld [vmem:[#allocation5 + $0x8a8] sm:$0xf]
    %v402 = vld [vmem:[#allocation5 + $0x8ac] sm:$0xff]
    %v403 = vld [vmem:[#allocation5 + $0x8b4] sm:$0xff]
    %v404 = vld [vmem:[#allocation5 + $0x8bc] sm:$0xf]
    %v405 = vld [vmem:[#allocation5 + $0x8c0] sm:$0xff]
    %v406 = vld [vmem:[#allocation5 + $0x8c8] sm:$0xff]
    %v407 = vld [vmem:[#allocation5 + $0x8d0] sm:$0xf]
    %v408 = vld [vmem:[#allocation5 + $0x8d4] sm:$0xff]
    %v409 = vld [vmem:[#allocation5 + $0x8dc] sm:$0xff]
    %v410 = vld [vmem:[#allocation5 + $0x8e4] sm:$0xf]
    %v411 = vld [vmem:[#allocation5 + $0x8e8] sm:$0xff]
    %v412 = vld [vmem:[#allocation5 + $0x8f0] sm:$0xff]
    %v413 = vld [vmem:[#allocation5 + $0x8f8] sm:$0xf]
    %v414 = vld [vmem:[#allocation5 + $0x8fc] sm:$0xff]
    %v415 = vld [vmem:[#allocation5 + $0x904] sm:$0xff]
    %v416 = vld [vmem:[#allocation5 + $0x90c] sm:$0xf]
    %v417 = vld [vmem:[#allocation5 + $0x910] sm:$0xff]
    %v418 = vld [vmem:[#allocation5 + $0x918] sm:$0xff]
    %v419 = vld [vmem:[#allocation5 + $0x920] sm:$0xf]
    %v420 = vld [vmem:[#allocation5 + $0x924] sm:$0xff]
    %v421 = vld [vmem:[#allocation5 + $0x92c] sm:$0xff]
    %v422 = vld [vmem:[#allocation5 + $0x934] sm:$0xf]
    %v423 = vld [vmem:[#allocation5 + $0x938] sm:$0xff]
    %v424 = vld [vmem:[#allocation5 + $0x940] sm:$0xff]
    %v425 = vld [vmem:[#allocation5 + $0x948] sm:$0xf]
    %v426 = vld [vmem:[#allocation5 + $0x94c] sm:$0xff]
    %v427 = vld [vmem:[#allocation5 + $0x954] sm:$0xff]
    %v428 = vld [vmem:[#allocation5 + $0x95c] sm:$0xf]
    %v429 = vld [vmem:[#allocation5 + $0x960] sm:$0xff]
    %v430 = vld [vmem:[#allocation5 + $0x968] sm:$0xff]
    %v431 = vld [vmem:[#allocation5 + $0x970] sm:$0xf]
    %v432 = vld [vmem:[#allocation5 + $0x974] sm:$0xff]
    %v433 = vld [vmem:[#allocation5 + $0x97c] sm:$0xff]
    %v434 = vld [vmem:[#allocation5 + $0x984] sm:$0xf]
    %v435 = vld [vmem:[#allocation5 + $0x988] sm:$0xff]
    %v436 = vld [vmem:[#allocation5 + $0x990] sm:$0xff]
    %v437 = vld [vmem:[#allocation5 + $0x998] sm:$0xf]
    %v438 = vld [vmem:[#allocation5 + $0x99c] sm:$0xff]
    %v439 = vld [vmem:[#allocation5 + $0x9a4] sm:$0xff]
    %v440 = vld [vmem:[#allocation5 + $0x9ac] sm:$0xf]
    %v441 = vld [vmem:[#allocation5 + $0x9b0] sm:$0xff]
    %v442 = vld [vmem:[#allocation5 + $0x9b8] sm:$0xff]
    %v443 = vld [vmem:[#allocation5 + $0x9c0] sm:$0xf]
    %v444 = vld [vmem:[#allocation5 + $0x9c4] sm:$0xff]
    %v445 = vld [vmem:[#allocation5 + $0x9cc] sm:$0xff]
    %v446 = vld [vmem:[#allocation5 + $0x9d4] sm:$0xf]
    %v447 = vld [vmem:[#allocation5 + $0x9d8] sm:$0xff]
    %v448 = vld [vmem:[#allocation5 + $0x9e0] sm:$0xff]
    %v449 = vld [vmem:[#allocation5 + $0x9e8] sm:$0xf]
    %v450 = vld [vmem:[#allocation5 + $0x9ec] sm:$0xff]
    %v451 = vld [vmem:[#allocation5 + $0x9f4] sm:$0xff]
    %v452 = vld [vmem:[#allocation5 + $0x9fc] sm:$0xf]
    %454 = vst [vmem:[#allocation1] ss:$9 sm:$0xff] %v68
    %v455 = vld [vmem:[#allocation1] sm:$0xff]
    %v456 = vld [vmem:[#allocation1 + $0x9] sm:$0xff]
    %v457 = vld [vmem:[#allocation1 + $0x12] sm:$0xff]
    %v458 = vld [vmem:[#allocation1 + $0x1b] sm:$0xff]
    %v459 = vld [vmem:[#allocation1 + $0x24] sm:$0xff]
    %v460 = vld [vmem:[#allocation1 + $0x2d] sm:$0xff]
    %v461 = vld [vmem:[#allocation1 + $0x36] sm:$0xff]
    %v462 = vld [vmem:[#allocation1 + $0x3f] sm:$0xff]
    %v855 = vunpack.c.l.b16 %v69
    %v856 = vunpack.c.h.b16 %v69
    %v857 = vunpack.c.l.b16 %v70
    %v858 = vunpack.c.h.b16 %v70
    %v859 = vunpack.c.l.b16 %v71
    %v860 = vunpack.c.l.b16 %v72
    %v861 = vunpack.c.h.b16 %v72
    %v862 = vunpack.c.l.b16 %v73
    %v863 = vunpack.c.h.b16 %v73
    %v864 = vunpack.c.l.b16 %v74
    %v865 = vunpack.c.l.b16 %v75
    %v866 = vunpack.c.h.b16 %v75
    %v867 = vunpack.c.l.b16 %v76
    %v868 = vunpack.c.h.b16 %v76
    %v869 = vunpack.c.l.b16 %v77
    %v870 = vunpack.c.l.b16 %v78
    %v871 = vunpack.c.h.b16 %v78
    %v872 = vunpack.c.l.b16 %v79
    %v873 = vunpack.c.h.b16 %v79
    %v874 = vunpack.c.l.b16 %v80
    %v875 = vunpack.c.l.b16 %v81
    %v876 = vunpack.c.h.b16 %v81
    %v877 = vunpack.c.l.b16 %v82
    %v878 = vunpack.c.h.b16 %v82
    %v879 = vunpack.c.l.b16 %v83
    %v880 = vunpack.c.l.b16 %v84
    %v881 = vunpack.c.h.b16 %v84
    %v882 = vunpack.c.l.b16 %v85
    %v883 = vunpack.c.h.b16 %v85
    %v884 = vunpack.c.l.b16 %v86
    %v885 = vunpack.c.l.b16 %v87
    %v886 = vunpack.c.h.b16 %v87
    %v887 = vunpack.c.l.b16 %v88
    %v888 = vunpack.c.h.b16 %v88
    %v889 = vunpack.c.l.b16 %v89
    %v890 = vunpack.c.l.b16 %v90
    %v891 = vunpack.c.h.b16 %v90
    %v892 = vunpack.c.l.b16 %v91
    %v893 = vunpack.c.h.b16 %v91
    %v894 = vunpack.c.l.b16 %v92
    %v895 = vunpack.c.l.b16 %v93
    %v896 = vunpack.c.h.b16 %v93
    %v897 = vunpack.c.l.b16 %v94
    %v898 = vunpack.c.h.b16 %v94
    %v899 = vunpack.c.l.b16 %v95
    %v900 = vunpack.c.l.b16 %v96
    %v901 = vunpack.c.h.b16 %v96
    %v902 = vunpack.c.l.b16 %v97
    %v903 = vunpack.c.h.b16 %v97
    %v904 = vunpack.c.l.b16 %v98
    %v905 = vunpack.c.l.b16 %v99
    %v906 = vunpack.c.h.b16 %v99
    %v907 = vunpack.c.l.b16 %v100
    %v908 = vunpack.c.h.b16 %v100
    %v909 = vunpack.c.l.b16 %v101
    %v910 = vunpack.c.l.b16 %v102
    %v911 = vunpack.c.h.b16 %v102
    %v912 = vunpack.c.l.b16 %v103
    %v913 = vunpack.c.h.b16 %v103
    %v914 = vunpack.c.l.b16 %v104
    %v915 = vunpack.c.l.b16 %v105
    %v916 = vunpack.c.h.b16 %v105
    %v917 = vunpack.c.l.b16 %v106
    %v918 = vunpack.c.h.b16 %v106
    %v919 = vunpack.c.l.b16 %v107
    %v920 = vunpack.c.l.b16 %v108
    %v921 = vunpack.c.h.b16 %v108
    %v922 = vunpack.c.l.b16 %v109
    %v923 = vunpack.c.h.b16 %v109
    %v924 = vunpack.c.l.b16 %v110
    %v925 = vunpack.c.l.b16 %v111
    %v926 = vunpack.c.h.b16 %v111
    %v927 = vunpack.c.l.b16 %v112
    %v928 = vunpack.c.h.b16 %v112
    %v929 = vunpack.c.l.b16 %v113
    %v930 = vunpack.c.l.b16 %v114
    %v931 = vunpack.c.h.b16 %v114
    %v932 = vunpack.c.l.b16 %v115
    %v933 = vunpack.c.h.b16 %v115
    %v934 = vunpack.c.l.b16 %v116
    %v935 = vunpack.c.l.b16 %v117
    %v936 = vunpack.c.h.b16 %v117
    %v937 = vunpack.c.l.b16 %v118
    %v938 = vunpack.c.h.b16 %v118
    %v939 = vunpack.c.l.b16 %v119
    %v940 = vunpack.c.l.b16 %v120
    %v941 = vunpack.c.h.b16 %v120
    %v942 = vunpack.c.l.b16 %v121
    %v943 = vunpack.c.h.b16 %v121
    %v944 = vunpack.c.l.b16 %v122
    %v945 = vunpack.c.l.b16 %v123
    %v946 = vunpack.c.h.b16 %v123
    %v947 = vunpack.c.l.b16 %v124
    %v948 = vunpack.c.h.b16 %v124
    %v949 = vunpack.c.l.b16 %v125
    %v950 = vunpack.c.l.b16 %v126
    %v951 = vunpack.c.h.b16 %v126
    %v952 = vunpack.c.l.b16 %v127
    %v953 = vunpack.c.h.b16 %v127
    %v954 = vunpack.c.l.b16 %v128
    %v955 = vunpack.c.l.b16 %v129
    %v956 = vunpack.c.h.b16 %v129
    %v957 = vunpack.c.l.b16 %v130
    %v958 = vunpack.c.h.b16 %v130
    %v959 = vunpack.c.l.b16 %v131
    %v960 = vunpack.c.l.b16 %v132
    %v961 = vunpack.c.h.b16 %v132
    %v962 = vunpack.c.l.b16 %v133
    %v963 = vunpack.c.h.b16 %v133
    %v964 = vunpack.c.l.b16 %v134
    %v965 = vunpack.c.l.b16 %v135
    %v966 = vunpack.c.h.b16 %v135
    %v967 = vunpack.c.l.b16 %v136
    %v968 = vunpack.c.h.b16 %v136
    %v969 = vunpack.c.l.b16 %v137
    %v970 = vunpack.c.l.b16 %v138
    %v971 = vunpack.c.h.b16 %v138
    %v972 = vunpack.c.l.b16 %v139
    %v973 = vunpack.c.h.b16 %v139
    %v974 = vunpack.c.l.b16 %v140
    %v975 = vunpack.c.l.b16 %v141
    %v976 = vunpack.c.h.b16 %v141
    %v977 = vunpack.c.l.b16 %v142
    %v978 = vunpack.c.h.b16 %v142
    %v979 = vunpack.c.l.b16 %v143
    %v980 = vunpack.c.l.b16 %v144
    %v981 = vunpack.c.h.b16 %v144
    %v982 = vunpack.c.l.b16 %v145
    %v983 = vunpack.c.h.b16 %v145
    %v984 = vunpack.c.l.b16 %v146
    %v985 = vunpack.c.l.b16 %v147
    %v986 = vunpack.c.h.b16 %v147
    %v987 = vunpack.c.l.b16 %v148
    %v988 = vunpack.c.h.b16 %v148
    %v989 = vunpack.c.l.b16 %v149
    %v990 = vunpack.c.l.b16 %v150
    %v991 = vunpack.c.h.b16 %v150
    %v992 = vunpack.c.l.b16 %v151
    %v993 = vunpack.c.h.b16 %v151
    %v994 = vunpack.c.l.b16 %v152
    %v995 = vunpack.c.l.b16 %v153
    %v996 = vunpack.c.h.b16 %v153
    %v997 = vunpack.c.l.b16 %v154
    %v998 = vunpack.c.h.b16 %v154
    %v999 = vunpack.c.l.b16 %v155
    %v1000 = vunpack.c.l.b16 %v156
    %v1001 = vunpack.c.h.b16 %v156
    %v1002 = vunpack.c.l.b16 %v157
    %v1003 = vunpack.c.h.b16 %v157
    %v1004 = vunpack.c.l.b16 %v158
    %v1005 = vunpack.c.l.b16 %v159
    %v1006 = vunpack.c.h.b16 %v159
    %v1007 = vunpack.c.l.b16 %v160
    %v1008 = vunpack.c.h.b16 %v160
    %v1009 = vunpack.c.l.b16 %v161
    %v1010 = vunpack.c.l.b16 %v162
    %v1011 = vunpack.c.h.b16 %v162
    %v1012 = vunpack.c.l.b16 %v163
    %v1013 = vunpack.c.h.b16 %v163
    %v1014 = vunpack.c.l.b16 %v164
    %v1015 = vunpack.c.l.b16 %v165
    %v1016 = vunpack.c.h.b16 %v165
    %v1017 = vunpack.c.l.b16 %v166
    %v1018 = vunpack.c.h.b16 %v166
    %v1019 = vunpack.c.l.b16 %v167
    %v1020 = vunpack.c.l.b16 %v168
    %v1021 = vunpack.c.h.b16 %v168
    %v1022 = vunpack.c.l.b16 %v169
    %v1023 = vunpack.c.h.b16 %v169
    %v1024 = vunpack.c.l.b16 %v170
    %v1025 = vunpack.c.l.b16 %v171
    %v1026 = vunpack.c.h.b16 %v171
    %v1027 = vunpack.c.l.b16 %v172
    %v1028 = vunpack.c.h.b16 %v172
    %v1029 = vunpack.c.l.b16 %v173
    %v1030 = vunpack.c.l.b16 %v174
    %v1031 = vunpack.c.h.b16 %v174
    %v1032 = vunpack.c.l.b16 %v175
    %v1033 = vunpack.c.h.b16 %v175
    %v1034 = vunpack.c.l.b16 %v176
    %v1035 = vunpack.c.l.b16 %v177
    %v1036 = vunpack.c.h.b16 %v177
    %v1037 = vunpack.c.l.b16 %v178
    %v1038 = vunpack.c.h.b16 %v178
    %v1039 = vunpack.c.l.b16 %v179
    %v1040 = vunpack.c.l.b16 %v180
    %v1041 = vunpack.c.h.b16 %v180
    %v1042 = vunpack.c.l.b16 %v181
    %v1043 = vunpack.c.h.b16 %v181
    %v1044 = vunpack.c.l.b16 %v182
    %v1045 = vunpack.c.l.b16 %v183
    %v1046 = vunpack.c.h.b16 %v183
    %v1047 = vunpack.c.l.b16 %v184
    %v1048 = vunpack.c.h.b16 %v184
    %v1049 = vunpack.c.l.b16 %v185
    %v1050 = vunpack.c.l.b16 %v186
    %v1051 = vunpack.c.h.b16 %v186
    %v1052 = vunpack.c.l.b16 %v187
    %v1053 = vunpack.c.h.b16 %v187
    %v1054 = vunpack.c.l.b16 %v188
    %v1055 = vunpack.c.l.b16 %v189
    %v1056 = vunpack.c.h.b16 %v189
    %v1057 = vunpack.c.l.b16 %v190
    %v1058 = vunpack.c.h.b16 %v190
    %v1059 = vunpack.c.l.b16 %v191
    %v1060 = vunpack.c.l.b16 %v192
    %v1061 = vunpack.c.h.b16 %v192
    %v1062 = vunpack.c.l.b16 %v193
    %v1063 = vunpack.c.h.b16 %v193
    %v1064 = vunpack.c.l.b16 %v194
    %v1065 = vunpack.c.l.b16 %v195
    %v1066 = vunpack.c.h.b16 %v195
    %v1067 = vunpack.c.l.b16 %v196
    %v1068 = vunpack.c.h.b16 %v196
    %v1069 = vunpack.c.l.b16 %v197
    %v1070 = vunpack.c.l.b16 %v198
    %v1071 = vunpack.c.h.b16 %v198
    %v1072 = vunpack.c.l.b16 %v199
    %v1073 = vunpack.c.h.b16 %v199
    %v1074 = vunpack.c.l.b16 %v200
    %v1075 = vunpack.c.l.b16 %v201
    %v1076 = vunpack.c.h.b16 %v201
    %v1077 = vunpack.c.l.b16 %v202
    %v1078 = vunpack.c.h.b16 %v202
    %v1079 = vunpack.c.l.b16 %v203
    %v1080 = vunpack.c.l.b16 %v204
    %v1081 = vunpack.c.h.b16 %v204
    %v1082 = vunpack.c.l.b16 %v205
    %v1083 = vunpack.c.h.b16 %v205
    %v1084 = vunpack.c.l.b16 %v206
    %v1085 = vunpack.c.l.b16 %v207
    %v1086 = vunpack.c.h.b16 %v207
    %v1087 = vunpack.c.l.b16 %v208
    %v1088 = vunpack.c.h.b16 %v208
    %v1089 = vunpack.c.l.b16 %v209
    %v1090 = vunpack.c.l.b16 %v210
    %v1091 = vunpack.c.h.b16 %v210
    %v1092 = vunpack.c.l.b16 %v211
    %v1093 = vunpack.c.h.b16 %v211
    %v1094 = vunpack.c.l.b16 %v212
    %v1095 = vunpack.c.l.b16 %v213
    %v1096 = vunpack.c.h.b16 %v213
    %v1097 = vunpack.c.l.b16 %v214
    %v1098 = vunpack.c.h.b16 %v214
    %v1099 = vunpack.c.l.b16 %v215
    %v1100 = vunpack.c.l.b16 %v216
    %v1101 = vunpack.c.h.b16 %v216
    %v1102 = vunpack.c.l.b16 %v217
    %v1103 = vunpack.c.h.b16 %v217
    %v1104 = vunpack.c.l.b16 %v218
    %v1105 = vunpack.c.l.b16 %v219
    %v1106 = vunpack.c.h.b16 %v219
    %v1107 = vunpack.c.l.b16 %v220
    %v1108 = vunpack.c.h.b16 %v220
    %v1109 = vunpack.c.l.b16 %v221
    %v1110 = vunpack.c.l.b16 %v222
    %v1111 = vunpack.c.h.b16 %v222
    %v1112 = vunpack.c.l.b16 %v223
    %v1113 = vunpack.c.h.b16 %v223
    %v1114 = vunpack.c.l.b16 %v224
    %v1115 = vunpack.c.l.b16 %v225
    %v1116 = vunpack.c.h.b16 %v225
    %v1117 = vunpack.c.l.b16 %v226
    %v1118 = vunpack.c.h.b16 %v226
    %v1119 = vunpack.c.l.b16 %v227
    %v1120 = vunpack.c.l.b16 %v228
    %v1121 = vunpack.c.h.b16 %v228
    %v1122 = vunpack.c.l.b16 %v229
    %v1123 = vunpack.c.h.b16 %v229
    %v1124 = vunpack.c.l.b16 %v230
    %v1125 = vunpack.c.l.b16 %v231
    %v1126 = vunpack.c.h.b16 %v231
    %v1127 = vunpack.c.l.b16 %v232
    %v1128 = vunpack.c.h.b16 %v232
    %v1129 = vunpack.c.l.b16 %v233
    %v1130 = vunpack.c.l.b16 %v234
    %v1131 = vunpack.c.h.b16 %v234
    %v1132 = vunpack.c.l.b16 %v235
    %v1133 = vunpack.c.h.b16 %v235
    %v1134 = vunpack.c.l.b16 %v236
    %v1135 = vunpack.c.l.b16 %v237
    %v1136 = vunpack.c.h.b16 %v237
    %v1137 = vunpack.c.l.b16 %v238
    %v1138 = vunpack.c.h.b16 %v238
    %v1139 = vunpack.c.l.b16 %v239
    %v1140 = vunpack.c.l.b16 %v240
    %v1141 = vunpack.c.h.b16 %v240
    %v1142 = vunpack.c.l.b16 %v241
    %v1143 = vunpack.c.h.b16 %v241
    %v1144 = vunpack.c.l.b16 %v242
    %v1145 = vunpack.c.l.b16 %v243
    %v1146 = vunpack.c.h.b16 %v243
    %v1147 = vunpack.c.l.b16 %v244
    %v1148 = vunpack.c.h.b16 %v244
    %v1149 = vunpack.c.l.b16 %v245
    %v1150 = vunpack.c.l.b16 %v246
    %v1151 = vunpack.c.h.b16 %v246
    %v1152 = vunpack.c.l.b16 %v247
    %v1153 = vunpack.c.h.b16 %v247
    %v1154 = vunpack.c.l.b16 %v248
    %v1155 = vunpack.c.l.b16 %v249
    %v1156 = vunpack.c.h.b16 %v249
    %v1157 = vunpack.c.l.b16 %v250
    %v1158 = vunpack.c.h.b16 %v250
    %v1159 = vunpack.c.l.b16 %v251
    %v1160 = vunpack.c.l.b16 %v252
    %v1161 = vunpack.c.h.b16 %v252
    %v1162 = vunpack.c.l.b16 %v253
    %v1163 = vunpack.c.h.b16 %v253
    %v1164 = vunpack.c.l.b16 %v254
    %v1165 = vunpack.c.l.b16 %v255
    %v1166 = vunpack.c.h.b16 %v255
    %v1167 = vunpack.c.l.b16 %v256
    %v1168 = vunpack.c.h.b16 %v256
    %v1169 = vunpack.c.l.b16 %v257
    %v1170 = vunpack.c.l.b16 %v258
    %v1171 = vunpack.c.h.b16 %v258
    %v1172 = vunpack.c.l.b16 %v259
    %v1173 = vunpack.c.h.b16 %v259
    %v1174 = vunpack.c.l.b16 %v260
    %v1175 = vunpack.c.l.b16 %v261
    %v1176 = vunpack.c.h.b16 %v261
    %v1177 = vunpack.c.l.b16 %v262
    %v1178 = vunpack.c.h.b16 %v262
    %v1179 = vunpack.c.l.b16 %v263
    %v1180 = vunpack.c.l.b16 %v264
    %v1181 = vunpack.c.h.b16 %v264
    %v1182 = vunpack.c.l.b16 %v265
    %v1183 = vunpack.c.h.b16 %v265
    %v1184 = vunpack.c.l.b16 %v266
    %v1185 = vunpack.c.l.b16 %v267
    %v1186 = vunpack.c.h.b16 %v267
    %v1187 = vunpack.c.l.b16 %v268
    %v1188 = vunpack.c.h.b16 %v268
    %v1189 = vunpack.c.l.b16 %v269
    %v1190 = vunpack.c.l.b16 %v270
    %v1191 = vunpack.c.h.b16 %v270
    %v1192 = vunpack.c.l.b16 %v271
    %v1193 = vunpack.c.h.b16 %v271
    %v1194 = vunpack.c.l.b16 %v272
    %v1195 = vunpack.c.l.b16 %v273
    %v1196 = vunpack.c.h.b16 %v273
    %v1197 = vunpack.c.l.b16 %v274
    %v1198 = vunpack.c.h.b16 %v274
    %v1199 = vunpack.c.l.b16 %v275
    %v1200 = vunpack.c.l.b16 %v276
    %v1201 = vunpack.c.h.b16 %v276
    %v1202 = vunpack.c.l.b16 %v277
    %v1203 = vunpack.c.h.b16 %v277
    %v1204 = vunpack.c.l.b16 %v278
    %v1205 = vunpack.c.l.b16 %v279
    %v1206 = vunpack.c.h.b16 %v279
    %v1207 = vunpack.c.l.b16 %v280
    %v1208 = vunpack.c.h.b16 %v280
    %v1209 = vunpack.c.l.b16 %v281
    %v1210 = vunpack.c.l.b16 %v282
    %v1211 = vunpack.c.h.b16 %v282
    %v1212 = vunpack.c.l.b16 %v283
    %v1213 = vunpack.c.h.b16 %v283
    %v1214 = vunpack.c.l.b16 %v284
    %v1215 = vunpack.c.l.b16 %v285
    %v1216 = vunpack.c.h.b16 %v285
    %v1217 = vunpack.c.l.b16 %v286
    %v1218 = vunpack.c.h.b16 %v286
    %v1219 = vunpack.c.l.b16 %v287
    %v1220 = vunpack.c.l.b16 %v288
    %v1221 = vunpack.c.h.b16 %v288
    %v1222 = vunpack.c.l.b16 %v289
    %v1223 = vunpack.c.h.b16 %v289
    %v1224 = vunpack.c.l.b16 %v290
    %v1225 = vunpack.c.l.b16 %v291
    %v1226 = vunpack.c.h.b16 %v291
    %v1227 = vunpack.c.l.b16 %v292
    %v1228 = vunpack.c.h.b16 %v292
    %v1229 = vunpack.c.l.b16 %v293
    %v1230 = vunpack.c.l.b16 %v294
    %v1231 = vunpack.c.h.b16 %v294
    %v1232 = vunpack.c.l.b16 %v295
    %v1233 = vunpack.c.h.b16 %v295
    %v1234 = vunpack.c.l.b16 %v296
    %v1235 = vunpack.c.l.b16 %v297
    %v1236 = vunpack.c.h.b16 %v297
    %v1237 = vunpack.c.l.b16 %v298
    %v1238 = vunpack.c.h.b16 %v298
    %v1239 = vunpack.c.l.b16 %v299
    %v1240 = vunpack.c.l.b16 %v300
    %v1241 = vunpack.c.h.b16 %v300
    %v1242 = vunpack.c.l.b16 %v301
    %v1243 = vunpack.c.h.b16 %v301
    %v1244 = vunpack.c.l.b16 %v302
    %v1245 = vunpack.c.l.b16 %v303
    %v1246 = vunpack.c.h.b16 %v303
    %v1247 = vunpack.c.l.b16 %v304
    %v1248 = vunpack.c.h.b16 %v304
    %v1249 = vunpack.c.l.b16 %v305
    %v1250 = vunpack.c.l.b16 %v306
    %v1251 = vunpack.c.h.b16 %v306
    %v1252 = vunpack.c.l.b16 %v307
    %v1253 = vunpack.c.h.b16 %v307
    %v1254 = vunpack.c.l.b16 %v308
    %v1255 = vunpack.c.l.b16 %v309
    %v1256 = vunpack.c.h.b16 %v309
    %v1257 = vunpack.c.l.b16 %v310
    %v1258 = vunpack.c.h.b16 %v310
    %v1259 = vunpack.c.l.b16 %v311
    %v1260 = vunpack.c.l.b16 %v312
    %v1261 = vunpack.c.h.b16 %v312
    %v1262 = vunpack.c.l.b16 %v313
    %v1263 = vunpack.c.h.b16 %v313
    %v1264 = vunpack.c.l.b16 %v314
    %v1265 = vunpack.c.l.b16 %v315
    %v1266 = vunpack.c.h.b16 %v315
    %v1267 = vunpack.c.l.b16 %v316
    %v1268 = vunpack.c.h.b16 %v316
    %v1269 = vunpack.c.l.b16 %v317
    %v1270 = vunpack.c.l.b16 %v318
    %v1271 = vunpack.c.h.b16 %v318
    %v1272 = vunpack.c.l.b16 %v319
    %v1273 = vunpack.c.h.b16 %v319
    %v1274 = vunpack.c.l.b16 %v320
    %v1275 = vunpack.c.l.b16 %v321
    %v1276 = vunpack.c.h.b16 %v321
    %v1277 = vunpack.c.l.b16 %v322
    %v1278 = vunpack.c.h.b16 %v322
    %v1279 = vunpack.c.l.b16 %v323
    %v1280 = vunpack.c.l.b16 %v324
    %v1281 = vunpack.c.h.b16 %v324
    %v1282 = vunpack.c.l.b16 %v325
    %v1283 = vunpack.c.h.b16 %v325
    %v1284 = vunpack.c.l.b16 %v326
    %v1285 = vunpack.c.l.b16 %v327
    %v1286 = vunpack.c.h.b16 %v327
    %v1287 = vunpack.c.l.b16 %v328
    %v1288 = vunpack.c.h.b16 %v328
    %v1289 = vunpack.c.l.b16 %v329
    %v1290 = vunpack.c.l.b16 %v330
    %v1291 = vunpack.c.h.b16 %v330
    %v1292 = vunpack.c.l.b16 %v331
    %v1293 = vunpack.c.h.b16 %v331
    %v1294 = vunpack.c.l.b16 %v332
    %v1295 = vunpack.c.l.b16 %v333
    %v1296 = vunpack.c.h.b16 %v333
    %v1297 = vunpack.c.l.b16 %v334
    %v1298 = vunpack.c.h.b16 %v334
    %v1299 = vunpack.c.l.b16 %v335
    %v1300 = vunpack.c.l.b16 %v336
    %v1301 = vunpack.c.h.b16 %v336
    %v1302 = vunpack.c.l.b16 %v337
    %v1303 = vunpack.c.h.b16 %v337
    %v1304 = vunpack.c.l.b16 %v338
    %v1305 = vunpack.c.l.b16 %v339
    %v1306 = vunpack.c.h.b16 %v339
    %v1307 = vunpack.c.l.b16 %v340
    %v1308 = vunpack.c.h.b16 %v340
    %v1309 = vunpack.c.l.b16 %v341
    %v1310 = vunpack.c.l.b16 %v342
    %v1311 = vunpack.c.h.b16 %v342
    %v1312 = vunpack.c.l.b16 %v343
    %v1313 = vunpack.c.h.b16 %v343
    %v1314 = vunpack.c.l.b16 %v344
    %v1315 = vunpack.c.l.b16 %v345
    %v1316 = vunpack.c.h.b16 %v345
    %v1317 = vunpack.c.l.b16 %v346
    %v1318 = vunpack.c.h.b16 %v346
    %v1319 = vunpack.c.l.b16 %v347
    %v1320 = vunpack.c.l.b16 %v348
    %v1321 = vunpack.c.h.b16 %v348
    %v1322 = vunpack.c.l.b16 %v349
    %v1323 = vunpack.c.h.b16 %v349
    %v1324 = vunpack.c.l.b16 %v350
    %v1325 = vunpack.c.l.b16 %v351
    %v1326 = vunpack.c.h.b16 %v351
    %v1327 = vunpack.c.l.b16 %v352
    %v1328 = vunpack.c.h.b16 %v352
    %v1329 = vunpack.c.l.b16 %v353
    %v1330 = vunpack.c.l.b16 %v354
    %v1331 = vunpack.c.h.b16 %v354
    %v1332 = vunpack.c.l.b16 %v355
    %v1333 = vunpack.c.h.b16 %v355
    %v1334 = vunpack.c.l.b16 %v356
    %v1335 = vunpack.c.l.b16 %v357
    %v1336 = vunpack.c.h.b16 %v357
    %v1337 = vunpack.c.l.b16 %v358
    %v1338 = vunpack.c.h.b16 %v358
    %v1339 = vunpack.c.l.b16 %v359
    %v1340 = vunpack.c.l.b16 %v360
    %v1341 = vunpack.c.h.b16 %v360
    %v1342 = vunpack.c.l.b16 %v361
    %v1343 = vunpack.c.h.b16 %v361
    %v1344 = vunpack.c.l.b16 %v362
    %v1345 = vunpack.c.l.b16 %v363
    %v1346 = vunpack.c.h.b16 %v363
    %v1347 = vunpack.c.l.b16 %v364
    %v1348 = vunpack.c.h.b16 %v364
    %v1349 = vunpack.c.l.b16 %v365
    %v1350 = vunpack.c.l.b16 %v366
    %v1351 = vunpack.c.h.b16 %v366
    %v1352 = vunpack.c.l.b16 %v367
    %v1353 = vunpack.c.h.b16 %v367
    %v1354 = vunpack.c.l.b16 %v368
    %v1355 = vunpack.c.l.b16 %v369
    %v1356 = vunpack.c.h.b16 %v369
    %v1357 = vunpack.c.l.b16 %v370
    %v1358 = vunpack.c.h.b16 %v370
    %v1359 = vunpack.c.l.b16 %v371
    %v1360 = vunpack.c.l.b16 %v372
    %v1361 = vunpack.c.h.b16 %v372
    %v1362 = vunpack.c.l.b16 %v373
    %v1363 = vunpack.c.h.b16 %v373
    %v1364 = vunpack.c.l.b16 %v374
    %v1365 = vunpack.c.l.b16 %v375
    %v1366 = vunpack.c.h.b16 %v375
    %v1367 = vunpack.c.l.b16 %v376
    %v1368 = vunpack.c.h.b16 %v376
    %v1369 = vunpack.c.l.b16 %v377
    %v1370 = vunpack.c.l.b16 %v378
    %v1371 = vunpack.c.h.b16 %v378
    %v1372 = vunpack.c.l.b16 %v379
    %v1373 = vunpack.c.h.b16 %v379
    %v1374 = vunpack.c.l.b16 %v380
    %v1375 = vunpack.c.l.b16 %v381
    %v1376 = vunpack.c.h.b16 %v381
    %v1377 = vunpack.c.l.b16 %v382
    %v1378 = vunpack.c.h.b16 %v382
    %v1379 = vunpack.c.l.b16 %v383
    %v1380 = vunpack.c.l.b16 %v384
    %v1381 = vunpack.c.h.b16 %v384
    %v1382 = vunpack.c.l.b16 %v385
    %v1383 = vunpack.c.h.b16 %v385
    %v1384 = vunpack.c.l.b16 %v386
    %v1385 = vunpack.c.l.b16 %v387
    %v1386 = vunpack.c.h.b16 %v387
    %v1387 = vunpack.c.l.b16 %v388
    %v1388 = vunpack.c.h.b16 %v388
    %v1389 = vunpack.c.l.b16 %v389
    %v1390 = vunpack.c.l.b16 %v390
    %v1391 = vunpack.c.h.b16 %v390
    %v1392 = vunpack.c.l.b16 %v391
    %v1393 = vunpack.c.h.b16 %v391
    %v1394 = vunpack.c.l.b16 %v392
    %v1395 = vunpack.c.l.b16 %v393
    %v1396 = vunpack.c.h.b16 %v393
    %v1397 = vunpack.c.l.b16 %v394
    %v1398 = vunpack.c.h.b16 %v394
    %v1399 = vunpack.c.l.b16 %v395
    %v1400 = vunpack.c.l.b16 %v396
    %v1401 = vunpack.c.h.b16 %v396
    %v1402 = vunpack.c.l.b16 %v397
    %v1403 = vunpack.c.h.b16 %v397
    %v1404 = vunpack.c.l.b16 %v398
    %v1405 = vunpack.c.l.b16 %v399
    %v1406 = vunpack.c.h.b16 %v399
    %v1407 = vunpack.c.l.b16 %v400
    %v1408 = vunpack.c.h.b16 %v400
    %v1409 = vunpack.c.l.b16 %v401
    %v1410 = vunpack.c.l.b16 %v402
    %v1411 = vunpack.c.h.b16 %v402
    %v1412 = vunpack.c.l.b16 %v403
    %v1413 = vunpack.c.h.b16 %v403
    %v1414 = vunpack.c.l.b16 %v404
    %v1415 = vunpack.c.l.b16 %v405
    %v1416 = vunpack.c.h.b16 %v405
    %v1417 = vunpack.c.l.b16 %v406
    %v1418 = vunpack.c.h.b16 %v406
    %v1419 = vunpack.c.l.b16 %v407
    %v1420 = vunpack.c.l.b16 %v408
    %v1421 = vunpack.c.h.b16 %v408
    %v1422 = vunpack.c.l.b16 %v409
    %v1423 = vunpack.c.h.b16 %v409
    %v1424 = vunpack.c.l.b16 %v410
    %v1425 = vunpack.c.l.b16 %v411
    %v1426 = vunpack.c.h.b16 %v411
    %v1427 = vunpack.c.l.b16 %v412
    %v1428 = vunpack.c.h.b16 %v412
    %v1429 = vunpack.c.l.b16 %v413
    %v1430 = vunpack.c.l.b16 %v414
    %v1431 = vunpack.c.h.b16 %v414
    %v1432 = vunpack.c.l.b16 %v415
    %v1433 = vunpack.c.h.b16 %v415
    %v1434 = vunpack.c.l.b16 %v416
    %v1435 = vunpack.c.l.b16 %v417
    %v1436 = vunpack.c.h.b16 %v417
    %v1437 = vunpack.c.l.b16 %v418
    %v1438 = vunpack.c.h.b16 %v418
    %v1439 = vunpack.c.l.b16 %v419
    %v1440 = vunpack.c.l.b16 %v420
    %v1441 = vunpack.c.h.b16 %v420
    %v1442 = vunpack.c.l.b16 %v421
    %v1443 = vunpack.c.h.b16 %v421
    %v1444 = vunpack.c.l.b16 %v422
    %v1445 = vunpack.c.l.b16 %v423
    %v1446 = vunpack.c.h.b16 %v423
    %v1447 = vunpack.c.l.b16 %v424
    %v1448 = vunpack.c.h.b16 %v424
    %v1449 = vunpack.c.l.b16 %v425
    %v1450 = vunpack.c.l.b16 %v426
    %v1451 = vunpack.c.h.b16 %v426
    %v1452 = vunpack.c.l.b16 %v427
    %v1453 = vunpack.c.h.b16 %v427
    %v1454 = vunpack.c.l.b16 %v428
    %v1455 = vunpack.c.l.b16 %v429
    %v1456 = vunpack.c.h.b16 %v429
    %v1457 = vunpack.c.l.b16 %v430
    %v1458 = vunpack.c.h.b16 %v430
    %v1459 = vunpack.c.l.b16 %v431
    %v1460 = vunpack.c.l.b16 %v432
    %v1461 = vunpack.c.h.b16 %v432
    %v1462 = vunpack.c.l.b16 %v433
    %v1463 = vunpack.c.h.b16 %v433
    %v1464 = vunpack.c.l.b16 %v434
    %v1465 = vunpack.c.l.b16 %v435
    %v1466 = vunpack.c.h.b16 %v435
    %v1467 = vunpack.c.l.b16 %v436
    %v1468 = vunpack.c.h.b16 %v436
    %v1469 = vunpack.c.l.b16 %v437
    %v1470 = vunpack.c.l.b16 %v438
    %v1471 = vunpack.c.h.b16 %v438
    %v1472 = vunpack.c.l.b16 %v439
    %v1473 = vunpack.c.h.b16 %v439
    %v1474 = vunpack.c.l.b16 %v440
    %v1475 = vunpack.c.l.b16 %v441
    %v1476 = vunpack.c.h.b16 %v441
    %v1477 = vunpack.c.l.b16 %v442
    %v1478 = vunpack.c.h.b16 %v442
    %v1479 = vunpack.c.l.b16 %v443
    %v1480 = vunpack.c.l.b16 %v444
    %v1481 = vunpack.c.h.b16 %v444
    %v1482 = vunpack.c.l.b16 %v445
    %v1483 = vunpack.c.h.b16 %v445
    %v1484 = vunpack.c.l.b16 %v446
    %v1485 = vunpack.c.l.b16 %v447
    %v1486 = vunpack.c.h.b16 %v447
    %v1487 = vunpack.c.l.b16 %v448
    %v1488 = vunpack.c.h.b16 %v448
    %v1489 = vunpack.c.l.b16 %v449
    %v1490 = vunpack.c.l.b16 %v450
    %v1491 = vunpack.c.h.b16 %v450
    %v1492 = vunpack.c.l.b16 %v451
    %v1493 = vunpack.c.h.b16 %v451
    %v1494 = vunpack.c.l.b16 %v452
    %v1495 = vpack.c.b16 %v860, %v855
    %v1496 = vpack.c.b16 %v861, %v856
    %v1497 = vpack.c.b16 %v862, %v857
    %v1498 = vpack.c.b16 %v863, %v858
    %v1499 = vpack.c.b16 %v864, %v859
    %v1500 = vpack.c.b16 %v870, %v865
    %v1501 = vpack.c.b16 %v871, %v866
    %v1502 = vpack.c.b16 %v872, %v867
    %v1503 = vpack.c.b16 %v873, %v868
    %v1504 = vpack.c.b16 %v874, %v869
    %v1505 = vpack.c.b16 %v880, %v875
    %v1506 = vpack.c.b16 %v881, %v876
    %v1507 = vpack.c.b16 %v882, %v877
    %v1508 = vpack.c.b16 %v883, %v878
    %v1509 = vpack.c.b16 %v884, %v879
    %v1510 = vpack.c.b16 %v890, %v885
    %v1511 = vpack.c.b16 %v891, %v886
    %v1512 = vpack.c.b16 %v892, %v887
    %v1513 = vpack.c.b16 %v893, %v888
    %v1514 = vpack.c.b16 %v894, %v889
    %v1515 = vpack.c.b16 %v900, %v895
    %v1516 = vpack.c.b16 %v901, %v896
    %v1517 = vpack.c.b16 %v902, %v897
    %v1518 = vpack.c.b16 %v903, %v898
    %v1519 = vpack.c.b16 %v904, %v899
    %v1520 = vpack.c.b16 %v910, %v905
    %v1521 = vpack.c.b16 %v911, %v906
    %v1522 = vpack.c.b16 %v912, %v907
    %v1523 = vpack.c.b16 %v913, %v908
    %v1524 = vpack.c.b16 %v914, %v909
    %v1525 = vpack.c.b16 %v920, %v915
    %v1526 = vpack.c.b16 %v921, %v916
    %v1527 = vpack.c.b16 %v922, %v917
    %v1528 = vpack.c.b16 %v923, %v918
    %v1529 = vpack.c.b16 %v924, %v919
    %v1530 = vpack.c.b16 %v930, %v925
    %v1531 = vpack.c.b16 %v931, %v926
    %v1532 = vpack.c.b16 %v932, %v927
    %v1533 = vpack.c.b16 %v933, %v928
    %v1534 = vpack.c.b16 %v934, %v929
    %v1535 = vpack.c.b16 %v940, %v935
    %v1536 = vpack.c.b16 %v941, %v936
    %v1537 = vpack.c.b16 %v942, %v937
    %v1538 = vpack.c.b16 %v943, %v938
    %v1539 = vpack.c.b16 %v944, %v939
    %v1540 = vpack.c.b16 %v950, %v945
    %v1541 = vpack.c.b16 %v951, %v946
    %v1542 = vpack.c.b16 %v952, %v947
    %v1543 = vpack.c.b16 %v953, %v948
    %v1544 = vpack.c.b16 %v954, %v949
    %v1545 = vpack.c.b16 %v960, %v955
    %v1546 = vpack.c.b16 %v961, %v956
    %v1547 = vpack.c.b16 %v962, %v957
    %v1548 = vpack.c.b16 %v963, %v958
    %v1549 = vpack.c.b16 %v964, %v959
    %v1550 = vpack.c.b16 %v970, %v965
    %v1551 = vpack.c.b16 %v971, %v966
    %v1552 = vpack.c.b16 %v972, %v967
    %v1553 = vpack.c.b16 %v973, %v968
    %v1554 = vpack.c.b16 %v974, %v969
    %v1555 = vpack.c.b16 %v980, %v975
    %v1556 = vpack.c.b16 %v981, %v976
    %v1557 = vpack.c.b16 %v982, %v977
    %v1558 = vpack.c.b16 %v983, %v978
    %v1559 = vpack.c.b16 %v984, %v979
    %v1560 = vpack.c.b16 %v990, %v985
    %v1561 = vpack.c.b16 %v991, %v986
    %v1562 = vpack.c.b16 %v992, %v987
    %v1563 = vpack.c.b16 %v993, %v988
    %v1564 = vpack.c.b16 %v994, %v989
    %v1565 = vpack.c.b16 %v1000, %v995
    %v1566 = vpack.c.b16 %v1001, %v996
    %v1567 = vpack.c.b16 %v1002, %v997
    %v1568 = vpack.c.b16 %v1003, %v998
    %v1569 = vpack.c.b16 %v1004, %v999
    %v1570 = vpack.c.b16 %v1010, %v1005
    %v1571 = vpack.c.b16 %v1011, %v1006
    %v1572 = vpack.c.b16 %v1012, %v1007
    %v1573 = vpack.c.b16 %v1013, %v1008
    %v1574 = vpack.c.b16 %v1014, %v1009
    %v1575 = vpack.c.b16 %v1020, %v1015
    %v1576 = vpack.c.b16 %v1021, %v1016
    %v1577 = vpack.c.b16 %v1022, %v1017
    %v1578 = vpack.c.b16 %v1023, %v1018
    %v1579 = vpack.c.b16 %v1024, %v1019
    %v1580 = vpack.c.b16 %v1030, %v1025
    %v1581 = vpack.c.b16 %v1031, %v1026
    %v1582 = vpack.c.b16 %v1032, %v1027
    %v1583 = vpack.c.b16 %v1033, %v1028
    %v1584 = vpack.c.b16 %v1034, %v1029
    %v1585 = vpack.c.b16 %v1040, %v1035
    %v1586 = vpack.c.b16 %v1041, %v1036
    %v1587 = vpack.c.b16 %v1042, %v1037
    %v1588 = vpack.c.b16 %v1043, %v1038
    %v1589 = vpack.c.b16 %v1044, %v1039
    %v1590 = vpack.c.b16 %v1050, %v1045
    %v1591 = vpack.c.b16 %v1051, %v1046
    %v1592 = vpack.c.b16 %v1052, %v1047
    %v1593 = vpack.c.b16 %v1053, %v1048
    %v1594 = vpack.c.b16 %v1054, %v1049
    %v1595 = vpack.c.b16 %v1060, %v1055
    %v1596 = vpack.c.b16 %v1061, %v1056
    %v1597 = vpack.c.b16 %v1062, %v1057
    %v1598 = vpack.c.b16 %v1063, %v1058
    %v1599 = vpack.c.b16 %v1064, %v1059
    %v1600 = vpack.c.b16 %v1070, %v1065
    %v1601 = vpack.c.b16 %v1071, %v1066
    %v1602 = vpack.c.b16 %v1072, %v1067
    %v1603 = vpack.c.b16 %v1073, %v1068
    %v1604 = vpack.c.b16 %v1074, %v1069
    %v1605 = vpack.c.b16 %v1080, %v1075
    %v1606 = vpack.c.b16 %v1081, %v1076
    %v1607 = vpack.c.b16 %v1082, %v1077
    %v1608 = vpack.c.b16 %v1083, %v1078
    %v1609 = vpack.c.b16 %v1084, %v1079
    %v1610 = vpack.c.b16 %v1090, %v1085
    %v1611 = vpack.c.b16 %v1091, %v1086
    %v1612 = vpack.c.b16 %v1092, %v1087
    %v1613 = vpack.c.b16 %v1093, %v1088
    %v1614 = vpack.c.b16 %v1094, %v1089
    %v1615 = vpack.c.b16 %v1100, %v1095
    %v1616 = vpack.c.b16 %v1101, %v1096
    %v1617 = vpack.c.b16 %v1102, %v1097
    %v1618 = vpack.c.b16 %v1103, %v1098
    %v1619 = vpack.c.b16 %v1104, %v1099
    %v1620 = vpack.c.b16 %v1110, %v1105
    %v1621 = vpack.c.b16 %v1111, %v1106
    %v1622 = vpack.c.b16 %v1112, %v1107
    %v1623 = vpack.c.b16 %v1113, %v1108
    %v1624 = vpack.c.b16 %v1114, %v1109
    %v1625 = vpack.c.b16 %v1120, %v1115
    %v1626 = vpack.c.b16 %v1121, %v1116
    %v1627 = vpack.c.b16 %v1122, %v1117
    %v1628 = vpack.c.b16 %v1123, %v1118
    %v1629 = vpack.c.b16 %v1124, %v1119
    %v1630 = vpack.c.b16 %v1130, %v1125
    %v1631 = vpack.c.b16 %v1131, %v1126
    %v1632 = vpack.c.b16 %v1132, %v1127
    %v1633 = vpack.c.b16 %v1133, %v1128
    %v1634 = vpack.c.b16 %v1134, %v1129
    %v1635 = vpack.c.b16 %v1140, %v1135
    %v1636 = vpack.c.b16 %v1141, %v1136
    %v1637 = vpack.c.b16 %v1142, %v1137
    %v1638 = vpack.c.b16 %v1143, %v1138
    %v1639 = vpack.c.b16 %v1144, %v1139
    %v1640 = vpack.c.b16 %v1150, %v1145
    %v1641 = vpack.c.b16 %v1151, %v1146
    %v1642 = vpack.c.b16 %v1152, %v1147
    %v1643 = vpack.c.b16 %v1153, %v1148
    %v1644 = vpack.c.b16 %v1154, %v1149
    %v1645 = vpack.c.b16 %v1160, %v1155
    %v1646 = vpack.c.b16 %v1161, %v1156
    %v1647 = vpack.c.b16 %v1162, %v1157
    %v1648 = vpack.c.b16 %v1163, %v1158
    %v1649 = vpack.c.b16 %v1164, %v1159
    %v1650 = vpack.c.b16 %v1170, %v1165
    %v1651 = vpack.c.b16 %v1171, %v1166
    %v1652 = vpack.c.b16 %v1172, %v1167
    %v1653 = vpack.c.b16 %v1173, %v1168
    %v1654 = vpack.c.b16 %v1174, %v1169
    %v1655 = vpack.c.b16 %v1180, %v1175
    %v1656 = vpack.c.b16 %v1181, %v1176
    %v1657 = vpack.c.b16 %v1182, %v1177
    %v1658 = vpack.c.b16 %v1183, %v1178
    %v1659 = vpack.c.b16 %v1184, %v1179
    %v1660 = vpack.c.b16 %v1190, %v1185
    %v1661 = vpack.c.b16 %v1191, %v1186
    %v1662 = vpack.c.b16 %v1192, %v1187
    %v1663 = vpack.c.b16 %v1193, %v1188
    %v1664 = vpack.c.b16 %v1194, %v1189
    %v1665 = vpack.c.b16 %v1200, %v1195
    %v1666 = vpack.c.b16 %v1201, %v1196
    %v1667 = vpack.c.b16 %v1202, %v1197
    %v1668 = vpack.c.b16 %v1203, %v1198
    %v1669 = vpack.c.b16 %v1204, %v1199
    %v1670 = vpack.c.b16 %v1210, %v1205
    %v1671 = vpack.c.b16 %v1211, %v1206
    %v1672 = vpack.c.b16 %v1212, %v1207
    %v1673 = vpack.c.b16 %v1213, %v1208
    %v1674 = vpack.c.b16 %v1214, %v1209
    %v1675 = vpack.c.b16 %v1220, %v1215
    %v1676 = vpack.c.b16 %v1221, %v1216
    %v1677 = vpack.c.b16 %v1222, %v1217
    %v1678 = vpack.c.b16 %v1223, %v1218
    %v1679 = vpack.c.b16 %v1224, %v1219
    %v1680 = vpack.c.b16 %v1230, %v1225
    %v1681 = vpack.c.b16 %v1231, %v1226
    %v1682 = vpack.c.b16 %v1232, %v1227
    %v1683 = vpack.c.b16 %v1233, %v1228
    %v1684 = vpack.c.b16 %v1234, %v1229
    %v1685 = vpack.c.b16 %v1240, %v1235
    %v1686 = vpack.c.b16 %v1241, %v1236
    %v1687 = vpack.c.b16 %v1242, %v1237
    %v1688 = vpack.c.b16 %v1243, %v1238
    %v1689 = vpack.c.b16 %v1244, %v1239
    %v1690 = vpack.c.b16 %v1250, %v1245
    %v1691 = vpack.c.b16 %v1251, %v1246
    %v1692 = vpack.c.b16 %v1252, %v1247
    %v1693 = vpack.c.b16 %v1253, %v1248
    %v1694 = vpack.c.b16 %v1254, %v1249
    %v1695 = vpack.c.b16 %v1260, %v1255
    %v1696 = vpack.c.b16 %v1261, %v1256
    %v1697 = vpack.c.b16 %v1262, %v1257
    %v1698 = vpack.c.b16 %v1263, %v1258
    %v1699 = vpack.c.b16 %v1264, %v1259
    %v1700 = vpack.c.b16 %v1270, %v1265
    %v1701 = vpack.c.b16 %v1271, %v1266
    %v1702 = vpack.c.b16 %v1272, %v1267
    %v1703 = vpack.c.b16 %v1273, %v1268
    %v1704 = vpack.c.b16 %v1274, %v1269
    %v1705 = vpack.c.b16 %v1280, %v1275
    %v1706 = vpack.c.b16 %v1281, %v1276
    %v1707 = vpack.c.b16 %v1282, %v1277
    %v1708 = vpack.c.b16 %v1283, %v1278
    %v1709 = vpack.c.b16 %v1284, %v1279
    %v1710 = vpack.c.b16 %v1290, %v1285
    %v1711 = vpack.c.b16 %v1291, %v1286
    %v1712 = vpack.c.b16 %v1292, %v1287
    %v1713 = vpack.c.b16 %v1293, %v1288
    %v1714 = vpack.c.b16 %v1294, %v1289
    %v1715 = vpack.c.b16 %v1300, %v1295
    %v1716 = vpack.c.b16 %v1301, %v1296
    %v1717 = vpack.c.b16 %v1302, %v1297
    %v1718 = vpack.c.b16 %v1303, %v1298
    %v1719 = vpack.c.b16 %v1304, %v1299
    %v1720 = vpack.c.b16 %v1310, %v1305
    %v1721 = vpack.c.b16 %v1311, %v1306
    %v1722 = vpack.c.b16 %v1312, %v1307
    %v1723 = vpack.c.b16 %v1313, %v1308
    %v1724 = vpack.c.b16 %v1314, %v1309
    %v1725 = vpack.c.b16 %v1320, %v1315
    %v1726 = vpack.c.b16 %v1321, %v1316
    %v1727 = vpack.c.b16 %v1322, %v1317
    %v1728 = vpack.c.b16 %v1323, %v1318
    %v1729 = vpack.c.b16 %v1324, %v1319
    %v1730 = vpack.c.b16 %v1330, %v1325
    %v1731 = vpack.c.b16 %v1331, %v1326
    %v1732 = vpack.c.b16 %v1332, %v1327
    %v1733 = vpack.c.b16 %v1333, %v1328
    %v1734 = vpack.c.b16 %v1334, %v1329
    %v1735 = vpack.c.b16 %v1340, %v1335
    %v1736 = vpack.c.b16 %v1341, %v1336
    %v1737 = vpack.c.b16 %v1342, %v1337
    %v1738 = vpack.c.b16 %v1343, %v1338
    %v1739 = vpack.c.b16 %v1344, %v1339
    %v1740 = vpack.c.b16 %v1350, %v1345
    %v1741 = vpack.c.b16 %v1351, %v1346
    %v1742 = vpack.c.b16 %v1352, %v1347
    %v1743 = vpack.c.b16 %v1353, %v1348
    %v1744 = vpack.c.b16 %v1354, %v1349
    %v1745 = vpack.c.b16 %v1360, %v1355
    %v1746 = vpack.c.b16 %v1361, %v1356
    %v1747 = vpack.c.b16 %v1362, %v1357
    %v1748 = vpack.c.b16 %v1363, %v1358
    %v1749 = vpack.c.b16 %v1364, %v1359
    %v1750 = vpack.c.b16 %v1370, %v1365
    %v1751 = vpack.c.b16 %v1371, %v1366
    %v1752 = vpack.c.b16 %v1372, %v1367
    %v1753 = vpack.c.b16 %v1373, %v1368
    %v1754 = vpack.c.b16 %v1374, %v1369
    %v1755 = vpack.c.b16 %v1380, %v1375
    %v1756 = vpack.c.b16 %v1381, %v1376
    %v1757 = vpack.c.b16 %v1382, %v1377
    %v1758 = vpack.c.b16 %v1383, %v1378
    %v1759 = vpack.c.b16 %v1384, %v1379
    %v1760 = vpack.c.b16 %v1390, %v1385
    %v1761 = vpack.c.b16 %v1391, %v1386
    %v1762 = vpack.c.b16 %v1392, %v1387
    %v1763 = vpack.c.b16 %v1393, %v1388
    %v1764 = vpack.c.b16 %v1394, %v1389
    %v1765 = vpack.c.b16 %v1400, %v1395
    %v1766 = vpack.c.b16 %v1401, %v1396
    %v1767 = vpack.c.b16 %v1402, %v1397
    %v1768 = vpack.c.b16 %v1403, %v1398
    %v1769 = vpack.c.b16 %v1404, %v1399
    %v1770 = vpack.c.b16 %v1410, %v1405
    %v1771 = vpack.c.b16 %v1411, %v1406
    %v1772 = vpack.c.b16 %v1412, %v1407
    %v1773 = vpack.c.b16 %v1413, %v1408
    %v1774 = vpack.c.b16 %v1414, %v1409
    %v1775 = vpack.c.b16 %v1420, %v1415
    %v1776 = vpack.c.b16 %v1421, %v1416
    %v1777 = vpack.c.b16 %v1422, %v1417
    %v1778 = vpack.c.b16 %v1423, %v1418
    %v1779 = vpack.c.b16 %v1424, %v1419
    %v1780 = vpack.c.b16 %v1430, %v1425
    %v1781 = vpack.c.b16 %v1431, %v1426
    %v1782 = vpack.c.b16 %v1432, %v1427
    %v1783 = vpack.c.b16 %v1433, %v1428
    %v1784 = vpack.c.b16 %v1434, %v1429
    %v1785 = vpack.c.b16 %v1440, %v1435
    %v1786 = vpack.c.b16 %v1441, %v1436
    %v1787 = vpack.c.b16 %v1442, %v1437
    %v1788 = vpack.c.b16 %v1443, %v1438
    %v1789 = vpack.c.b16 %v1444, %v1439
    %v1790 = vpack.c.b16 %v1450, %v1445
    %v1791 = vpack.c.b16 %v1451, %v1446
    %v1792 = vpack.c.b16 %v1452, %v1447
    %v1793 = vpack.c.b16 %v1453, %v1448
    %v1794 = vpack.c.b16 %v1454, %v1449
    %v1795 = vpack.c.b16 %v1460, %v1455
    %v1796 = vpack.c.b16 %v1461, %v1456
    %v1797 = vpack.c.b16 %v1462, %v1457
    %v1798 = vpack.c.b16 %v1463, %v1458
    %v1799 = vpack.c.b16 %v1464, %v1459
    %v1800 = vpack.c.b16 %v1470, %v1465
    %v1801 = vpack.c.b16 %v1471, %v1466
    %v1802 = vpack.c.b16 %v1472, %v1467
    %v1803 = vpack.c.b16 %v1473, %v1468
    %v1804 = vpack.c.b16 %v1474, %v1469
    %v1805 = vpack.c.b16 %v1480, %v1475
    %v1806 = vpack.c.b16 %v1481, %v1476
    %v1807 = vpack.c.b16 %v1482, %v1477
    %v1808 = vpack.c.b16 %v1483, %v1478
    %v1809 = vpack.c.b16 %v1484, %v1479
    %v1810 = vpack.c.b16 %v1490, %v1485
    %v1811 = vpack.c.b16 %v1491, %v1486
    %v1812 = vpack.c.b16 %v1492, %v1487
    %v1813 = vpack.c.b16 %v1493, %v1488
    %v1814 = vpack.c.b16 %v1494, %v1489
    %2135 = vmatpush.bf16.msra.mxu0 %v1530
    %2136 = vmatpush.bf16.msra.mxu0 %v1525
    %2137 = vmatpush.bf16.msra.mxu0 %v1520
    %2138 = vmatpush.bf16.msra.mxu0 %v1515
    %2139 = vmatpush.bf16.msra.mxu0 %v1510
    %2140 = vmatpush.bf16.msra.mxu0 %v1505
    %2141 = vmatpush.bf16.msra.mxu0 %v1500
    %2142 = vmatpush.bf16.msra.mxu0 %v1495
    %2143 = vmatmul.bf16.gmra.mxu0 %v455
    %v2144 = vpop.f32.mrf.mxu0
    %v2145 = vadd.f32 0.0, %v2144
    %v2146 = vpop.f32.mrf.mxu0
    %2147 = vdwg.mxu0
    %2148 = vmatpush.bf16.msra.mxu0 %v1570
    %2149 = vmatpush.bf16.msra.mxu0 %v1565
    %2150 = vmatpush.bf16.msra.mxu0 %v1560
    %2151 = vmatpush.bf16.msra.mxu0 %v1555
    %2152 = vmatpush.bf16.msra.mxu0 %v1550
    %2153 = vmatpush.bf16.msra.mxu0 %v1545
    %2154 = vmatpush.bf16.msra.mxu0 %v1540
    %2155 = vmatpush.bf16.msra.mxu0 %v1535
    %2156 = vmatmul.bf16.gmra.mxu0 %v456
    %v2157 = vpop.f32.mrf.mxu0
    %v2158 = vadd.f32 %v2145, %v2157
    %v2159 = vpop.f32.mrf.mxu0
    %2160 = vdwg.mxu0
    %2161 = vmatpush.bf16.msra.mxu0 %v1610
    %2162 = vmatpush.bf16.msra.mxu0 %v1605
    %2163 = vmatpush.bf16.msra.mxu0 %v1600
    %2164 = vmatpush.bf16.msra.mxu0 %v1595
    %2165 = vmatpush.bf16.msra.mxu0 %v1590
    %2166 = vmatpush.bf16.msra.mxu0 %v1585
    %2167 = vmatpush.bf16.msra.mxu0 %v1580
    %2168 = vmatpush.bf16.msra.mxu0 %v1575
    %2169 = vmatmul.bf16.gmra.mxu0 %v457
    %v2170 = vpop.f32.mrf.mxu0
    %v2171 = vadd.f32 %v2158, %v2170
    %v2172 = vpop.f32.mrf.mxu0
    %2173 = vdwg.mxu0
    %2174 = vmatpush.bf16.msra.mxu0 %v1650
    %2175 = vmatpush.bf16.msra.mxu0 %v1645
    %2176 = vmatpush.bf16.msra.mxu0 %v1640
    %2177 = vmatpush.bf16.msra.mxu0 %v1635
    %2178 = vmatpush.bf16.msra.mxu0 %v1630
    %2179 = vmatpush.bf16.msra.mxu0 %v1625
    %2180 = vmatpush.bf16.msra.mxu0 %v1620
    %2181 = vmatpush.bf16.msra.mxu0 %v1615
    %2182 = vmatmul.bf16.gmra.mxu0 %v458
    %v2183 = vpop.f32.mrf.mxu0
    %v2184 = vadd.f32 %v2171, %v2183
    %v2185 = vpop.f32.mrf.mxu0
    %2186 = vdwg.mxu0
    %2187 = vmatpush.bf16.msra.mxu0 %v1690
    %2188 = vmatpush.bf16.msra.mxu0 %v1685
    %2189 = vmatpush.bf16.msra.mxu0 %v1680
    %2190 = vmatpush.bf16.msra.mxu0 %v1675
    %2191 = vmatpush.bf16.msra.mxu0 %v1670
    %2192 = vmatpush.bf16.msra.mxu0 %v1665
    %2193 = vmatpush.bf16.msra.mxu0 %v1660
    %2194 = vmatpush.bf16.msra.mxu0 %v1655
    %2195 = vmatmul.bf16.gmra.mxu0 %v459
    %v2196 = vpop.f32.mrf.mxu0
    %v2197 = vadd.f32 %v2184, %v2196
    %v2198 = vpop.f32.mrf.mxu0
    %2199 = vdwg.mxu0
    %2200 = vmatpush.bf16.msra.mxu0 %v1730
    %2201 = vmatpush.bf16.msra.mxu0 %v1725
    %2202 = vmatpush.bf16.msra.mxu0 %v1720
    %2203 = vmatpush.bf16.msra.mxu0 %v1715
    %2204 = vmatpush.bf16.msra.mxu0 %v1710
    %2205 = vmatpush.bf16.msra.mxu0 %v1705
    %2206 = vmatpush.bf16.msra.mxu0 %v1700
    %2207 = vmatpush.bf16.msra.mxu0 %v1695
    %2208 = vmatmul.bf16.gmra.mxu0 %v460
    %v2209 = vpop.f32.mrf.mxu0
    %v2210 = vadd.f32 %v2197, %v2209
    %v2211 = vpop.f32.mrf.mxu0
    %2212 = vdwg.mxu0
    %2213 = vmatpush.bf16.msra.mxu0 %v1770
    %2214 = vmatpush.bf16.msra.mxu0 %v1765
    %2215 = vmatpush.bf16.msra.mxu0 %v1760
    %2216 = vmatpush.bf16.msra.mxu0 %v1755
    %2217 = vmatpush.bf16.msra.mxu0 %v1750
    %2218 = vmatpush.bf16.msra.mxu0 %v1745
    %2219 = vmatpush.bf16.msra.mxu0 %v1740
    %2220 = vmatpush.bf16.msra.mxu0 %v1735
    %2221 = vmatmul.bf16.gmra.mxu0 %v461
    %v2222 = vpop.f32.mrf.mxu0
    %v2223 = vadd.f32 %v2210, %v2222
    %v2224 = vpop.f32.mrf.mxu0
    %2225 = vdwg.mxu0
    %2226 = vmatpush.bf16.msra.mxu0 %v1810
    %2227 = vmatpush.bf16.msra.mxu0 %v1805
    %2228 = vmatpush.bf16.msra.mxu0 %v1800
    %2229 = vmatpush.bf16.msra.mxu0 %v1795
    %2230 = vmatpush.bf16.msra.mxu0 %v1790
    %2231 = vmatpush.bf16.msra.mxu0 %v1785
    %2232 = vmatpush.bf16.msra.mxu0 %v1780
    %2233 = vmatpush.bf16.msra.mxu0 %v1775
    %2234 = vmatmul.bf16.gmra.mxu0 %v462
    %v2235 = vpop.f32.mrf.mxu0
    %v2236 = vadd.f32 %v2223, %v2235
    %v2237 = vpop.f32.mrf.mxu0
    %2238 = vdwg.mxu0
    %2239 = vmatpush.bf16.msra.mxu0 %v1531
    %2240 = vmatpush.bf16.msra.mxu0 %v1526
    %2241 = vmatpush.bf16.msra.mxu0 %v1521
    %2242 = vmatpush.bf16.msra.mxu0 %v1516
    %2243 = vmatpush.bf16.msra.mxu0 %v1511
    %2244 = vmatpush.bf16.msra.mxu0 %v1506
    %2245 = vmatpush.bf16.msra.mxu0 %v1501
    %2246 = vmatpush.bf16.msra.mxu0 %v1496
    %2247 = vmatmul.bf16.gmra.mxu0 %v455
    %v2248 = vpop.f32.mrf.mxu0
    %v2249 = vadd.f32 0.0, %v2248
    %v2250 = vpop.f32.mrf.mxu0
    %2251 = vdwg.mxu0
    %2252 = vmatpush.bf16.msra.mxu0 %v1571
    %2253 = vmatpush.bf16.msra.mxu0 %v1566
    %2254 = vmatpush.bf16.msra.mxu0 %v1561
    %2255 = vmatpush.bf16.msra.mxu0 %v1556
    %2256 = vmatpush.bf16.msra.mxu0 %v1551
    %2257 = vmatpush.bf16.msra.mxu0 %v1546
    %2258 = vmatpush.bf16.msra.mxu0 %v1541
    %2259 = vmatpush.bf16.msra.mxu0 %v1536
    %2260 = vmatmul.bf16.gmra.mxu0 %v456
    %v2261 = vpop.f32.mrf.mxu0
    %v2262 = vadd.f32 %v2249, %v2261
    %v2263 = vpop.f32.mrf.mxu0
    %2264 = vdwg.mxu0
    %2265 = vmatpush.bf16.msra.mxu0 %v1611
    %2266 = vmatpush.bf16.msra.mxu0 %v1606
    %2267 = vmatpush.bf16.msra.mxu0 %v1601
    %2268 = vmatpush.bf16.msra.mxu0 %v1596
    %2269 = vmatpush.bf16.msra.mxu0 %v1591
    %2270 = vmatpush.bf16.msra.mxu0 %v1586
    %2271 = vmatpush.bf16.msra.mxu0 %v1581
    %2272 = vmatpush.bf16.msra.mxu0 %v1576
    %2273 = vmatmul.bf16.gmra.mxu0 %v457
    %v2274 = vpop.f32.mrf.mxu0
    %v2275 = vadd.f32 %v2262, %v2274
    %v2276 = vpop.f32.mrf.mxu0
    %2277 = vdwg.mxu0
    %2278 = vmatpush.bf16.msra.mxu0 %v1651
    %2279 = vmatpush.bf16.msra.mxu0 %v1646
    %2280 = vmatpush.bf16.msra.mxu0 %v1641
    %2281 = vmatpush.bf16.msra.mxu0 %v1636
    %2282 = vmatpush.bf16.msra.mxu0 %v1631
    %2283 = vmatpush.bf16.msra.mxu0 %v1626
    %2284 = vmatpush.bf16.msra.mxu0 %v1621
    %2285 = vmatpush.bf16.msra.mxu0 %v1616
    %2286 = vmatmul.bf16.gmra.mxu0 %v458
    %v2287 = vpop.f32.mrf.mxu0
    %v2288 = vadd.f32 %v2275, %v2287
    %v2289 = vpop.f32.mrf.mxu0
    %2290 = vdwg.mxu0
    %2291 = vmatpush.bf16.msra.mxu0 %v1691
    %2292 = vmatpush.bf16.msra.mxu0 %v1686
    %2293 = vmatpush.bf16.msra.mxu0 %v1681
    %2294 = vmatpush.bf16.msra.mxu0 %v1676
    %2295 = vmatpush.bf16.msra.mxu0 %v1671
    %2296 = vmatpush.bf16.msra.mxu0 %v1666
    %2297 = vmatpush.bf16.msra.mxu0 %v1661
    %2298 = vmatpush.bf16.msra.mxu0 %v1656
    %2299 = vmatmul.bf16.gmra.mxu0 %v459
    %v2300 = vpop.f32.mrf.mxu0
    %v2301 = vadd.f32 %v2288, %v2300
    %v2302 = vpop.f32.mrf.mxu0
    %2303 = vdwg.mxu0
    %2304 = vmatpush.bf16.msra.mxu0 %v1731
    %2305 = vmatpush.bf16.msra.mxu0 %v1726
    %2306 = vmatpush.bf16.msra.mxu0 %v1721
    %2307 = vmatpush.bf16.msra.mxu0 %v1716
    %2308 = vmatpush.bf16.msra.mxu0 %v1711
    %2309 = vmatpush.bf16.msra.mxu0 %v1706
    %2310 = vmatpush.bf16.msra.mxu0 %v1701
    %2311 = vmatpush.bf16.msra.mxu0 %v1696
    %2312 = vmatmul.bf16.gmra.mxu0 %v460
    %v2313 = vpop.f32.mrf.mxu0
    %v2314 = vadd.f32 %v2301, %v2313
    %v2315 = vpop.f32.mrf.mxu0
    %2316 = vdwg.mxu0
    %2317 = vmatpush.bf16.msra.mxu0 %v1771
    %2318 = vmatpush.bf16.msra.mxu0 %v1766
    %2319 = vmatpush.bf16.msra.mxu0 %v1761
    %2320 = vmatpush.bf16.msra.mxu0 %v1756
    %2321 = vmatpush.bf16.msra.mxu0 %v1751
    %2322 = vmatpush.bf16.msra.mxu0 %v1746
    %2323 = vmatpush.bf16.msra.mxu0 %v1741
    %2324 = vmatpush.bf16.msra.mxu0 %v1736
    %2325 = vmatmul.bf16.gmra.mxu0 %v461
    %v2326 = vpop.f32.mrf.mxu0
    %v2327 = vadd.f32 %v2314, %v2326
    %v2328 = vpop.f32.mrf.mxu0
    %2329 = vdwg.mxu0
    %2330 = vmatpush.bf16.msra.mxu0 %v1811
    %2331 = vmatpush.bf16.msra.mxu0 %v1806
    %2332 = vmatpush.bf16.msra.mxu0 %v1801
    %2333 = vmatpush.bf16.msra.mxu0 %v1796
    %2334 = vmatpush.bf16.msra.mxu0 %v1791
    %2335 = vmatpush.bf16.msra.mxu0 %v1786
    %2336 = vmatpush.bf16.msra.mxu0 %v1781
    %2337 = vmatpush.bf16.msra.mxu0 %v1776
    %2338 = vmatmul.bf16.gmra.mxu0 %v462
    %v2339 = vpop.f32.mrf.mxu0
    %v2340 = vadd.f32 %v2327, %v2339
    %v2341 = vpop.f32.mrf.mxu0
    %2342 = vdwg.mxu0
    %2343 = vmatpush.bf16.msra.mxu0 %v1532
    %2344 = vmatpush.bf16.msra.mxu0 %v1527
    %2345 = vmatpush.bf16.msra.mxu0 %v1522
    %2346 = vmatpush.bf16.msra.mxu0 %v1517
    %2347 = vmatpush.bf16.msra.mxu0 %v1512
    %2348 = vmatpush.bf16.msra.mxu0 %v1507
    %2349 = vmatpush.bf16.msra.mxu0 %v1502
    %2350 = vmatpush.bf16.msra.mxu0 %v1497
    %2351 = vmatmul.bf16.gmra.mxu0 %v455
    %v2352 = vpop.f32.mrf.mxu0
    %v2353 = vadd.f32 0.0, %v2352
    %v2354 = vpop.f32.mrf.mxu0
    %2355 = vdwg.mxu0
    %2356 = vmatpush.bf16.msra.mxu0 %v1572
    %2357 = vmatpush.bf16.msra.mxu0 %v1567
    %2358 = vmatpush.bf16.msra.mxu0 %v1562
    %2359 = vmatpush.bf16.msra.mxu0 %v1557
    %2360 = vmatpush.bf16.msra.mxu0 %v1552
    %2361 = vmatpush.bf16.msra.mxu0 %v1547
    %2362 = vmatpush.bf16.msra.mxu0 %v1542
    %2363 = vmatpush.bf16.msra.mxu0 %v1537
    %2364 = vmatmul.bf16.gmra.mxu0 %v456
    %v2365 = vpop.f32.mrf.mxu0
    %v2366 = vadd.f32 %v2353, %v2365
    %v2367 = vpop.f32.mrf.mxu0
    %2368 = vdwg.mxu0
    %2369 = vmatpush.bf16.msra.mxu0 %v1612
    %2370 = vmatpush.bf16.msra.mxu0 %v1607
    %2371 = vmatpush.bf16.msra.mxu0 %v1602
    %2372 = vmatpush.bf16.msra.mxu0 %v1597
    %2373 = vmatpush.bf16.msra.mxu0 %v1592
    %2374 = vmatpush.bf16.msra.mxu0 %v1587
    %2375 = vmatpush.bf16.msra.mxu0 %v1582
    %2376 = vmatpush.bf16.msra.mxu0 %v1577
    %2377 = vmatmul.bf16.gmra.mxu0 %v457
    %v2378 = vpop.f32.mrf.mxu0
    %v2379 = vadd.f32 %v2366, %v2378
    %v2380 = vpop.f32.mrf.mxu0
    %2381 = vdwg.mxu0
    %2382 = vmatpush.bf16.msra.mxu0 %v1652
    %2383 = vmatpush.bf16.msra.mxu0 %v1647
    %2384 = vmatpush.bf16.msra.mxu0 %v1642
    %2385 = vmatpush.bf16.msra.mxu0 %v1637
    %2386 = vmatpush.bf16.msra.mxu0 %v1632
    %2387 = vmatpush.bf16.msra.mxu0 %v1627
    %2388 = vmatpush.bf16.msra.mxu0 %v1622
    %2389 = vmatpush.bf16.msra.mxu0 %v1617
    %2390 = vmatmul.bf16.gmra.mxu0 %v458
    %v2391 = vpop.f32.mrf.mxu0
    %v2392 = vadd.f32 %v2379, %v2391
    %v2393 = vpop.f32.mrf.mxu0
    %2394 = vdwg.mxu0
    %2395 = vmatpush.bf16.msra.mxu0 %v1692
    %2396 = vmatpush.bf16.msra.mxu0 %v1687
    %2397 = vmatpush.bf16.msra.mxu0 %v1682
    %2398 = vmatpush.bf16.msra.mxu0 %v1677
    %2399 = vmatpush.bf16.msra.mxu0 %v1672
    %2400 = vmatpush.bf16.msra.mxu0 %v1667
    %2401 = vmatpush.bf16.msra.mxu0 %v1662
    %2402 = vmatpush.bf16.msra.mxu0 %v1657
    %2403 = vmatmul.bf16.gmra.mxu0 %v459
    %v2404 = vpop.f32.mrf.mxu0
    %v2405 = vadd.f32 %v2392, %v2404
    %v2406 = vpop.f32.mrf.mxu0
    %2407 = vdwg.mxu0
    %2408 = vmatpush.bf16.msra.mxu0 %v1732
    %2409 = vmatpush.bf16.msra.mxu0 %v1727
    %2410 = vmatpush.bf16.msra.mxu0 %v1722
    %2411 = vmatpush.bf16.msra.mxu0 %v1717
    %2412 = vmatpush.bf16.msra.mxu0 %v1712
    %2413 = vmatpush.bf16.msra.mxu0 %v1707
    %2414 = vmatpush.bf16.msra.mxu0 %v1702
    %2415 = vmatpush.bf16.msra.mxu0 %v1697
    %2416 = vmatmul.bf16.gmra.mxu0 %v460
    %v2417 = vpop.f32.mrf.mxu0
    %v2418 = vadd.f32 %v2405, %v2417
    %v2419 = vpop.f32.mrf.mxu0
    %2420 = vdwg.mxu0
    %2421 = vmatpush.bf16.msra.mxu0 %v1772
    %2422 = vmatpush.bf16.msra.mxu0 %v1767
    %2423 = vmatpush.bf16.msra.mxu0 %v1762
    %2424 = vmatpush.bf16.msra.mxu0 %v1757
    %2425 = vmatpush.bf16.msra.mxu0 %v1752
    %2426 = vmatpush.bf16.msra.mxu0 %v1747
    %2427 = vmatpush.bf16.msra.mxu0 %v1742
    %2428 = vmatpush.bf16.msra.mxu0 %v1737
    %2429 = vmatmul.bf16.gmra.mxu0 %v461
    %v2430 = vpop.f32.mrf.mxu0
    %v2431 = vadd.f32 %v2418, %v2430
    %v2432 = vpop.f32.mrf.mxu0
    %2433 = vdwg.mxu0
    %2434 = vmatpush.bf16.msra.mxu0 %v1812
    %2435 = vmatpush.bf16.msra.mxu0 %v1807
    %2436 = vmatpush.bf16.msra.mxu0 %v1802
    %2437 = vmatpush.bf16.msra.mxu0 %v1797
    %2438 = vmatpush.bf16.msra.mxu0 %v1792
    %2439 = vmatpush.bf16.msra.mxu0 %v1787
    %2440 = vmatpush.bf16.msra.mxu0 %v1782
    %2441 = vmatpush.bf16.msra.mxu0 %v1777
    %2442 = vmatmul.bf16.gmra.mxu0 %v462
    %v2443 = vpop.f32.mrf.mxu0
    %v2444 = vadd.f32 %v2431, %v2443
    %v2445 = vpop.f32.mrf.mxu0
    %2446 = vdwg.mxu0
    %2447 = vmatpush.bf16.msra.mxu0 %v1533
    %2448 = vmatpush.bf16.msra.mxu0 %v1528
    %2449 = vmatpush.bf16.msra.mxu0 %v1523
    %2450 = vmatpush.bf16.msra.mxu0 %v1518
    %2451 = vmatpush.bf16.msra.mxu0 %v1513
    %2452 = vmatpush.bf16.msra.mxu0 %v1508
    %2453 = vmatpush.bf16.msra.mxu0 %v1503
    %2454 = vmatpush.bf16.msra.mxu0 %v1498
    %2455 = vmatmul.bf16.gmra.mxu0 %v455
    %v2456 = vpop.f32.mrf.mxu0
    %v2457 = vadd.f32 0.0, %v2456
    %v2458 = vpop.f32.mrf.mxu0
    %2459 = vdwg.mxu0
    %2460 = vmatpush.bf16.msra.mxu0 %v1573
    %2461 = vmatpush.bf16.msra.mxu0 %v1568
    %2462 = vmatpush.bf16.msra.mxu0 %v1563
    %2463 = vmatpush.bf16.msra.mxu0 %v1558
    %2464 = vmatpush.bf16.msra.mxu0 %v1553
    %2465 = vmatpush.bf16.msra.mxu0 %v1548
    %2466 = vmatpush.bf16.msra.mxu0 %v1543
    %2467 = vmatpush.bf16.msra.mxu0 %v1538
    %2468 = vmatmul.bf16.gmra.mxu0 %v456
    %v2469 = vpop.f32.mrf.mxu0
    %v2470 = vadd.f32 %v2457, %v2469
    %v2471 = vpop.f32.mrf.mxu0
    %2472 = vdwg.mxu0
    %2473 = vmatpush.bf16.msra.mxu0 %v1613
    %2474 = vmatpush.bf16.msra.mxu0 %v1608
    %2475 = vmatpush.bf16.msra.mxu0 %v1603
    %2476 = vmatpush.bf16.msra.mxu0 %v1598
    %2477 = vmatpush.bf16.msra.mxu0 %v1593
    %2478 = vmatpush.bf16.msra.mxu0 %v1588
    %2479 = vmatpush.bf16.msra.mxu0 %v1583
    %2480 = vmatpush.bf16.msra.mxu0 %v1578
    %2481 = vmatmul.bf16.gmra.mxu0 %v457
    %v2482 = vpop.f32.mrf.mxu0
    %v2483 = vadd.f32 %v2470, %v2482
    %v2484 = vpop.f32.mrf.mxu0
    %2485 = vdwg.mxu0
    %2486 = vmatpush.bf16.msra.mxu0 %v1653
    %2487 = vmatpush.bf16.msra.mxu0 %v1648
    %2488 = vmatpush.bf16.msra.mxu0 %v1643
    %2489 = vmatpush.bf16.msra.mxu0 %v1638
    %2490 = vmatpush.bf16.msra.mxu0 %v1633
    %2491 = vmatpush.bf16.msra.mxu0 %v1628
    %2492 = vmatpush.bf16.msra.mxu0 %v1623
    %2493 = vmatpush.bf16.msra.mxu0 %v1618
    %2494 = vmatmul.bf16.gmra.mxu0 %v458
    %v2495 = vpop.f32.mrf.mxu0
    %v2496 = vadd.f32 %v2483, %v2495
    %v2497 = vpop.f32.mrf.mxu0
    %2498 = vdwg.mxu0
    %2499 = vmatpush.bf16.msra.mxu0 %v1693
    %2500 = vmatpush.bf16.msra.mxu0 %v1688
    %2501 = vmatpush.bf16.msra.mxu0 %v1683
    %2502 = vmatpush.bf16.msra.mxu0 %v1678
    %2503 = vmatpush.bf16.msra.mxu0 %v1673
    %2504 = vmatpush.bf16.msra.mxu0 %v1668
    %2505 = vmatpush.bf16.msra.mxu0 %v1663
    %2506 = vmatpush.bf16.msra.mxu0 %v1658
    %2507 = vmatmul.bf16.gmra.mxu0 %v459
    %v2508 = vpop.f32.mrf.mxu0
    %v2509 = vadd.f32 %v2496, %v2508
    %v2510 = vpop.f32.mrf.mxu0
    %2511 = vdwg.mxu0
    %2512 = vmatpush.bf16.msra.mxu0 %v1733
    %2513 = vmatpush.bf16.msra.mxu0 %v1728
    %2514 = vmatpush.bf16.msra.mxu0 %v1723
    %2515 = vmatpush.bf16.msra.mxu0 %v1718
    %2516 = vmatpush.bf16.msra.mxu0 %v1713
    %2517 = vmatpush.bf16.msra.mxu0 %v1708
    %2518 = vmatpush.bf16.msra.mxu0 %v1703
    %2519 = vmatpush.bf16.msra.mxu0 %v1698
    %2520 = vmatmul.bf16.gmra.mxu0 %v460
    %v2521 = vpop.f32.mrf.mxu0
    %v2522 = vadd.f32 %v2509, %v2521
    %v2523 = vpop.f32.mrf.mxu0
    %2524 = vdwg.mxu0
    %2525 = vmatpush.bf16.msra.mxu0 %v1773
    %2526 = vmatpush.bf16.msra.mxu0 %v1768
    %2527 = vmatpush.bf16.msra.mxu0 %v1763
    %2528 = vmatpush.bf16.msra.mxu0 %v1758
    %2529 = vmatpush.bf16.msra.mxu0 %v1753
    %2530 = vmatpush.bf16.msra.mxu0 %v1748
    %2531 = vmatpush.bf16.msra.mxu0 %v1743
    %2532 = vmatpush.bf16.msra.mxu0 %v1738
    %2533 = vmatmul.bf16.gmra.mxu0 %v461
    %v2534 = vpop.f32.mrf.mxu0
    %v2535 = vadd.f32 %v2522, %v2534
    %v2536 = vpop.f32.mrf.mxu0
    %2537 = vdwg.mxu0
    %2538 = vmatpush.bf16.msra.mxu0 %v1813
    %2539 = vmatpush.bf16.msra.mxu0 %v1808
    %2540 = vmatpush.bf16.msra.mxu0 %v1803
    %2541 = vmatpush.bf16.msra.mxu0 %v1798
    %2542 = vmatpush.bf16.msra.mxu0 %v1793
    %2543 = vmatpush.bf16.msra.mxu0 %v1788
    %2544 = vmatpush.bf16.msra.mxu0 %v1783
    %2545 = vmatpush.bf16.msra.mxu0 %v1778
    %2546 = vmatmul.bf16.gmra.mxu0 %v462
    %v2547 = vpop.f32.mrf.mxu0
    %v2548 = vadd.f32 %v2535, %v2547
    %v2549 = vpop.f32.mrf.mxu0
    %2550 = vdwg.mxu0
    %2551 = vmatpush.bf16.msra.mxu0 %v1534
    %2552 = vmatpush.bf16.msra.mxu0 %v1529
    %2553 = vmatpush.bf16.msra.mxu0 %v1524
    %2554 = vmatpush.bf16.msra.mxu0 %v1519
    %2555 = vmatpush.bf16.msra.mxu0 %v1514
    %2556 = vmatpush.bf16.msra.mxu0 %v1509
    %2557 = vmatpush.bf16.msra.mxu0 %v1504
    %2558 = vmatpush.bf16.msra.mxu0 %v1499
    %2559 = vmatmul.bf16.gmra.mxu0 %v455
    %v2560 = vpop.f32.mrf.mxu0
    %v2561 = vadd.f32 0.0, %v2560
    %v2562 = vpop.f32.mrf.mxu0
    %2563 = vdwg.mxu0
    %2564 = vmatpush.bf16.msra.mxu0 %v1574
    %2565 = vmatpush.bf16.msra.mxu0 %v1569
    %2566 = vmatpush.bf16.msra.mxu0 %v1564
    %2567 = vmatpush.bf16.msra.mxu0 %v1559
    %2568 = vmatpush.bf16.msra.mxu0 %v1554
    %2569 = vmatpush.bf16.msra.mxu0 %v1549
    %2570 = vmatpush.bf16.msra.mxu0 %v1544
    %2571 = vmatpush.bf16.msra.mxu0 %v1539
    %2572 = vmatmul.bf16.gmra.mxu0 %v456
    %v2573 = vpop.f32.mrf.mxu0
    %v2574 = vadd.f32 %v2561, %v2573
    %v2575 = vpop.f32.mrf.mxu0
    %2576 = vdwg.mxu0
    %2577 = vmatpush.bf16.msra.mxu0 %v1614
    %2578 = vmatpush.bf16.msra.mxu0 %v1609
    %2579 = vmatpush.bf16.msra.mxu0 %v1604
    %2580 = vmatpush.bf16.msra.mxu0 %v1599
    %2581 = vmatpush.bf16.msra.mxu0 %v1594
    %2582 = vmatpush.bf16.msra.mxu0 %v1589
    %2583 = vmatpush.bf16.msra.mxu0 %v1584
    %2584 = vmatpush.bf16.msra.mxu0 %v1579
    %2585 = vmatmul.bf16.gmra.mxu0 %v457
    %v2586 = vpop.f32.mrf.mxu0
    %v2587 = vadd.f32 %v2574, %v2586
    %v2588 = vpop.f32.mrf.mxu0
    %2589 = vdwg.mxu0
    %2590 = vmatpush.bf16.msra.mxu0 %v1654
    %2591 = vmatpush.bf16.msra.mxu0 %v1649
    %2592 = vmatpush.bf16.msra.mxu0 %v1644
    %2593 = vmatpush.bf16.msra.mxu0 %v1639
    %2594 = vmatpush.bf16.msra.mxu0 %v1634
    %2595 = vmatpush.bf16.msra.mxu0 %v1629
    %2596 = vmatpush.bf16.msra.mxu0 %v1624
    %2597 = vmatpush.bf16.msra.mxu0 %v1619
    %2598 = vmatmul.bf16.gmra.mxu0 %v458
    %v2599 = vpop.f32.mrf.mxu0
    %v2600 = vadd.f32 %v2587, %v2599
    %v2601 = vpop.f32.mrf.mxu0
    %2602 = vdwg.mxu0
    %2603 = vmatpush.bf16.msra.mxu0 %v1694
    %2604 = vmatpush.bf16.msra.mxu0 %v1689
    %2605 = vmatpush.bf16.msra.mxu0 %v1684
    %2606 = vmatpush.bf16.msra.mxu0 %v1679
    %2607 = vmatpush.bf16.msra.mxu0 %v1674
    %2608 = vmatpush.bf16.msra.mxu0 %v1669
    %2609 = vmatpush.bf16.msra.mxu0 %v1664
    %2610 = vmatpush.bf16.msra.mxu0 %v1659
    %2611 = vmatmul.bf16.gmra.mxu0 %v459
    %v2612 = vpop.f32.mrf.mxu0
    %v2613 = vadd.f32 %v2600, %v2612
    %v2614 = vpop.f32.mrf.mxu0
    %2615 = vdwg.mxu0
    %2616 = vmatpush.bf16.msra.mxu0 %v1734
    %2617 = vmatpush.bf16.msra.mxu0 %v1729
    %2618 = vmatpush.bf16.msra.mxu0 %v1724
    %2619 = vmatpush.bf16.msra.mxu0 %v1719
    %2620 = vmatpush.bf16.msra.mxu0 %v1714
    %2621 = vmatpush.bf16.msra.mxu0 %v1709
    %2622 = vmatpush.bf16.msra.mxu0 %v1704
    %2623 = vmatpush.bf16.msra.mxu0 %v1699
    %2624 = vmatmul.bf16.gmra.mxu0 %v460
    %v2625 = vpop.f32.mrf.mxu0
    %v2626 = vadd.f32 %v2613, %v2625
    %v2627 = vpop.f32.mrf.mxu0
    %2628 = vdwg.mxu0
    %2629 = vmatpush.bf16.msra.mxu0 %v1774
    %2630 = vmatpush.bf16.msra.mxu0 %v1769
    %2631 = vmatpush.bf16.msra.mxu0 %v1764
    %2632 = vmatpush.bf16.msra.mxu0 %v1759
    %2633 = vmatpush.bf16.msra.mxu0 %v1754
    %2634 = vmatpush.bf16.msra.mxu0 %v1749
    %2635 = vmatpush.bf16.msra.mxu0 %v1744
    %2636 = vmatpush.bf16.msra.mxu0 %v1739
    %2637 = vmatmul.bf16.gmra.mxu0 %v461
    %v2638 = vpop.f32.mrf.mxu0
    %v2639 = vadd.f32 %v2626, %v2638
    %v2640 = vpop.f32.mrf.mxu0
    %2641 = vdwg.mxu0
    %2642 = vmatpush.bf16.msra.mxu0 %v1814
    %2643 = vmatpush.bf16.msra.mxu0 %v1809
    %2644 = vmatpush.bf16.msra.mxu0 %v1804
    %2645 = vmatpush.bf16.msra.mxu0 %v1799
    %2646 = vmatpush.bf16.msra.mxu0 %v1794
    %2647 = vmatpush.bf16.msra.mxu0 %v1789
    %2648 = vmatpush.bf16.msra.mxu0 %v1784
    %2649 = vmatpush.bf16.msra.mxu0 %v1779
    %2650 = vmatmul.bf16.gmra.mxu0 %v462
    %v2651 = vpop.f32.mrf.mxu0
    %v2652 = vadd.f32 %v2639, %v2651
    %v2653 = vpop.f32.mrf.mxu0
    %2654 = vdwg.mxu0
    %v2659 = vrot.slane %v2340, 6
    %v2660 = vrot.slane %v2444, 4
    %v2661 = vrot.slane %v2548, 2
    %vm2662 = vcmask 1041408
    %v2663 = vsel %vm2662, %v2236, %v2659
    %vm2664 = vcmask 1045508
    %v2665 = vsel %vm2664, %v2660, %v2661
    %vm2666 = vcmask 1043456
    %v2667 = vsel %vm2666, %v2663, %v2665
    %v2669 = vadd.f32 %v64, %v2667
    %v2670 = vadd.f32 %v65, %v2652
    %2671 = vst [vmem:[#allocation8] sm:$0xff] %v2669
    %2672 = vst [vmem:[#allocation8 + $0x8] sm:$0x3] %v2670
    // Predicated region
    $region30: #{tpu_custom_call.1} parent=1 // pred_check
      %p2673 = pneg %p58
    $region31: #{tpu_custom_call.1} parent=1 // pred_check_branch
      %2675 = sbr.rel (%p2673) target = $region33
    $region32: #{tpu_custom_call.1} parent=1 // pred_region
      %v2676 = vld [vmem:[#allocation8] sm:$0xff]
      %v2677 = vld [vmem:[#allocation8 + $0x8] sm:$0x3]
      %v2678 = vld [vmem:[#allocation7] sm:$0x1f]
      %v2680 = vperm.slane %v2678, 0
      %v2681 = vperm.slane %v2678, 1
      %v2682 = vperm.slane %v2678, 2
      %v2683 = vperm.slane %v2678, 3
      %v2684 = vperm.slane %v2678, 4
      %v2686 = vrot.slane %v2681, 6
      %v2687 = vrot.slane %v2682, 4
      %v2688 = vrot.slane %v2683, 2
      %v2689 = vsel %vm2662, %v2680, %v2686
      %v2690 = vsel %vm2664, %v2687, %v2688
      %v2691 = vsel %vm2666, %v2689, %v2690
      %v2693 = vadd.f32 %v2676, %v2691
      %v2694 = vadd.f32 %v2677, %v2684
      %v2695 = vmax.f32 %v2693, 0.0
      %v2696 = vmax.f32 %v2694, 0.0
      %2697 = vst [vmem:[#allocation8] sm:$0xff] %v2695
      %2698 = vst [vmem:[#allocation8 + $0x8] sm:$0x3] %v2696
    $region33: #{tpu_custom_call.1} parent=1 // pred_fallthru
      _
    // Predicated region
    $region34: #{tpu_custom_call.1} parent=1 // pred_check
      _
    $region35: #{tpu_custom_call.1} parent=1 // pred_check_branch
      %2700 = sbr.rel (0) target = $region37
    $region36: #{tpu_custom_call.1} parent=1 // pred_region
      %2702 = vsyncadd [#allocation4], 0
      %s2704 = sshll.u32 [#allocation8], 4
      %s2705 = int_to_ptr.vmem [resolvable:$true] %s2704
      %s2706 = sshll.u32 %s3, 4
      %s2707 = int_to_ptr.hbm [resolvable:$true] %s2706
      %2709 = dma.vmem_to_hbm [thread:$0]  %s2705, 160, %s2707, [#allocation4]
    $region37: #{tpu_custom_call.1} parent=1 // pred_fallthru
      _
    // Predicated region
    $region38: #{tpu_custom_call.1} parent=1 // pred_check
      _
    $region39: #{tpu_custom_call.1} parent=1 // pred_check_branch
      %2711 = sbr.rel (0) target = $region41
    $region40: #{tpu_custom_call.1} parent=1 // pred_region
      %2713 = dma.done [#allocation4], 160
    $region41: #{tpu_custom_call.1} parent=1 // pred_fallthru
      _
    %2714 = vsyncpa [#allocation3], 1
    %2715 = vsyncpa [#allocation6], 1
    %2716 = vsyncpa [#allocation4], 1

</llo_original>
